<compile_context>
chip_gen: v6e
topology: v6e:2x2x1
jax: 0.10.0
libtpu: 0.0.40
codegen_flags: <defaults>
</compile_context>

<pallas_src>
import functools

import jax
import jax.numpy as jnp
from jax import lax
from jax.experimental import pallas as pl
from jax.experimental.pallas import tpu as pltpu

BN_EPS = 1e-5


def _cdiv(a, b):
    return -(-a // b)


def _vmem_limits():
    """Returns (vmem_limit_bytes, per-step tile budget), generation aware."""
    cap = None
    try:
        info = pltpu.get_tpu_info()
        cap = getattr(info, "vmem_capacity_bytes", None)
    except Exception:
        cap = None
    if cap is None:
        cap = 64 * 1024 * 1024                       # conservative default
    if cap >= 96 * 1024 * 1024:                      # v5e / v6e: 128 MiB VMEM
        return 96 * 1024 * 1024, 24 * 1024 * 1024
    return 40 * 1024 * 1024, 10 * 1024 * 1024        # v7x: 64 MiB VMEM


# --------------------------------------------------------------------------
# Fast path: single fused kernel (im2col-free conv + exact BN + ReLU).
# Valid for stride == 1 and problems that fit comfortably in VMEM.
# --------------------------------------------------------------------------
def _fast_path_fits(n, c, oc, kh, kw, l_in, l_out, budget):
    if n * kh * kw > 128:                # keep the unrolled trace small
        return False
    lane = lambda v: _cdiv(v, 128) * 128
    sub = lambda v, m: _cdiv(v, m) * m
    in_b = n * sub(c, 16) * lane(l_in) * 2            # bf16 input
    out_b = n * sub(oc, 8) * lane(l_out) * 4          # f32 output
    acc_b = out_b                                     # f32 accumulators
    total = 2 * (in_b + out_b) + acc_b
    return total <= min(budget, 8 * 1024 * 1024)


def _make_fused_small_kernel(n, c, oc, kh, kw, oh, ow, wp, l_out):
    hw = oh * ow

    def kernel(xf_ref, w_ref, gamma_ref, beta_ref, mask_ref, out_ref):
        # im2col-free conv: KH*KW shifted matmuls over the flattened padded
        # input (contiguous slices along the lane axis).  Columns where
        # (col % wp) >= ow are scratch; they are masked out of the statistics
        # and cropped by the wrapper.
        accs = []
        for b in range(n):
            acc = jnp.zeros((oc, l_out), jnp.float32)
            for i in range(kh):
                for j in range(kw):
                    start = i * wp + j
                    xs = xf_ref[b, :, start:start + l_out]      # (C, L_out)
                    acc = acc + jnp.dot(w_ref[i, j], xs,
                                        preferred_element_type=jnp.float32)
            accs.append(acc)

        # Exact two-pass BN batch statistics (everything resident in VMEM).
        mask = mask_ref[...]                                    # (1, L_out)
        cnt = jnp.float32(n * hw)
        mean = sum(jnp.sum(a * mask, axis=1, keepdims=True) for a in accs) / cnt
        var = sum(jnp.sum(mask * (a - mean) ** 2, axis=1, keepdims=True)
                  for a in accs) / cnt
        inv_std = lax.rsqrt(var + BN_EPS)
        scale = gamma_ref[...] * inv_std                        # (OC, 1)
        shift = beta_ref[...] - mean * scale

        for b in range(n):
            out_ref[b] = jnp.maximum(accs[b] * scale + shift, 0.0
                                     ).astype(out_ref.dtype)

    return kernel


# --------------------------------------------------------------------------
# Tiled path, pass 1: conv matmul (lane-dense) + per-(b, t) partial BN stats.
# --------------------------------------------------------------------------
def _make_conv_stats_kernel(hw, thw):
    def kernel(w_ref, p_ref, conv_ref, sum_ref, m2_ref):
        t = pl.program_id(1)
        # (OC, K) @ (K, THW) -> (OC, THW), f32 accumulation on the MXU.
        acc = jnp.dot(w_ref[...], p_ref[0], preferred_element_type=jnp.float32)
        conv_ref[0] = acc.astype(conv_ref.dtype)        # bf16 intermediate

        # Per-tile partial stats.  Columns >= hw are exact-zero padding: they
        # contribute 0 to the sum, and are masked out of the centered M2.
        rem = hw - t * thw                              # >= 1 by construction
        count = jnp.minimum(rem, thw).astype(jnp.float32)
        tile_sum = jnp.sum(acc, axis=1, keepdims=True)  # (OC, 1)
        tile_mean = tile_sum / count
        col = lax.broadcasted_iota(jnp.int32, acc.shape, 1)
        d = acc - tile_mean
        m2 = jnp.sum(jnp.where(col < rem, d * d, 0.0), axis=1, keepdims=True)
        sum_ref[0, 0] = tile_sum
        m2_ref[0, 0] = m2

    return kernel


# --------------------------------------------------------------------------
# Tiled path, pass 2: fused BN affine + ReLU (fully parallel over tiles).
# --------------------------------------------------------------------------
def _bn_relu_kernel(scale_ref, shift_ref, conv_ref, out_ref):
    y = conv_ref[0].astype(jnp.float32) * scale_ref[...] + shift_ref[...]
    out_ref[0] = jnp.maximum(y, 0.0).astype(out_ref.dtype)


def _pick_hw_tile(hw, k, oc, vmem_budget):
    """Largest 128-multiple HW tile fitting the per-step VMEM budget
    (double-buffered bf16 patches + bf16 conv out + resident bf16 weight)."""
    hw128 = _cdiv(hw, 128) * 128
    per_col = 4 * k + 4 * oc                   # bytes per HW column per step
    fixed = 4 * oc * k + 256 * 1024            # resident weight (2 bufs) + slack
    cap = max(128, ((vmem_budget - fixed) // per_col) // 128 * 128)
    return int(min(hw128, cap))


@functools.partial(jax.jit, static_argnames=("stride", "padding"))
def conv_batchnorm_relu(x, conv_w, conv_b, gamma, beta, *, stride, padding):
    """Forward pass of ConvBatchNormRelu. x: (N, C, H, W) NCHW float32."""
    # Conv bias is exactly cancelled by training-mode BN mean subtraction.
    del conv_b

    n, c, h, w = x.shape
    oc, _, kh, kw = conv_w.shape
    oh = (h + 2 * padding - kh) // stride + 1
    ow = (w + 2 * padding - kw) // stride + 1
    hw = oh * ow
    k = c * kh * kw

    vmem_limit, tile_budget = _vmem_limits()

    xb = x.astype(jnp.bfloat16)
    xp = jnp.pad(xb, ((0, 0), (0, 0), (padding, padding), (padding, padding)))
    hp, wp = h + 2 * padding, w + 2 * padding

    gamma_col = gamma.reshape(oc, 1).astype(jnp.float32)
    beta_col = beta.reshape(oc, 1).astype(jnp.float32)

    # -------------------- fast path: single fused kernel --------------------
    if stride == 1:
        l_out = oh * wp                       # padded-width output columns
        l_in = hp * wp + (kw - 1)             # flat input + tail slack
        if _fast_path_fits(n, c, oc, kh, kw, l_in, l_out, tile_budget):
            xflat = xp.reshape(n, c, hp * wp)
            xflat = jnp.pad(xflat, ((0, 0), (0, 0), (0, l_in - hp * wp)))
            w4 = jnp.transpose(conv_w, (2, 3, 0, 1)).astype(jnp.bfloat16)
            mask = (jnp.arange(l_out, dtype=jnp.int32) % wp < ow)
            mask = mask.astype(jnp.float32).reshape(1, l_out)

            kernel = _make_fused_small_kernel(n, c, oc, kh, kw, oh, ow, wp,
                                              l_out)
            out_flat = pl.pallas_call(
                kernel,
                out_shape=jax.ShapeDtypeStruct((n, oc, l_out), jnp.float32),
                grid_spec=pltpu.PrefetchScalarGridSpec(
                    num_scalar_prefetch=0,
                    grid=(1,),
                    in_specs=[
                        pl.BlockSpec((n, c, l_in), lambda i: (0, 0, 0)),
                        pl.BlockSpec((kh, kw, oc, c), lambda i: (0, 0, 0, 0)),
                        pl.BlockSpec((oc, 1), lambda i: (0, 0)),
                        pl.BlockSpec((oc, 1), lambda i: (0, 0)),
                        pl.BlockSpec((1, l_out), lambda i: (0, 0)),
                    ],
                    out_specs=pl.BlockSpec((n, oc, l_out), lambda i: (0, 0, 0)),
                ),
                compiler_params=pltpu.CompilerParams(
                    dimension_semantics=("arbitrary",),
                    vmem_limit_bytes=vmem_limit,
                ),
                cost_estimate=pl.CostEstimate(
                    flops=2 * n * l_out * k * oc + 8 * n * oc * l_out,
                    transcendentals=0,
                    bytes_accessed=n * c * l_in * 2 + oc * k * 2
                    + n * oc * l_out * 4 + l_out * 4 + 4 * oc * 4,
                ),
            )(xflat, w4, gamma_col, beta_col, mask)
            return out_flat.reshape(n, oc, oh, wp)[:, :, :, :ow]

    # -------------------- tiled path: two-pass pipeline --------------------
    # Host-side im2col in bf16, already in (N, K, HW) kernel layout.
    # TODO(synk): im2col-free tiled path via halo'd manual DMA.
    cols = []
    for i in range(kh):
        for j in range(kw):
            cols.append(
                xp[:, :, i:i + stride * oh:stride, j:j + stride * ow:stride])
    col = jnp.stack(cols, axis=2)                 # (N, C, KH*KW, OH, OW)
    patches = col.reshape(n, k, hw)               # (N, K, HW) bf16

    thw = _pick_hw_tile(hw, k, oc, tile_budget)
    num_t = _cdiv(hw, thw)
    hw_pad = num_t * thw
    if hw_pad != hw:
        patches = jnp.pad(patches, ((0, 0), (0, 0), (0, hw_pad - hw)))
    w_t = conv_w.reshape(oc, k).astype(jnp.bfloat16)   # (OC, K) bf16
    grid = (n, num_t)

    conv_out, psum, pm2 = pl.pallas_call(
        _make_conv_stats_kernel(hw, thw),
        out_shape=(
            jax.ShapeDtypeStruct((n, oc, hw_pad), jnp.bfloat16),
            jax.ShapeDtypeStruct((n, num_t, oc, 1), jnp.float32),
            jax.ShapeDtypeStruct((n, num_t, oc, 1), jnp.float32),
        ),
        grid_spec=pltpu.PrefetchScalarGridSpec(
            num_scalar_prefetch=0,
            grid=grid,
            in_specs=[
                pl.BlockSpec((oc, k), lambda b, t: (0, 0)),          # weight
                pl.BlockSpec((1, k, thw), lambda b, t: (b, 0, t)),   # patches
            ],
            out_specs=[
                pl.BlockSpec((1, oc, thw), lambda b, t: (b, 0, t)),  # conv
                pl.BlockSpec((1, 1, oc, 1), lambda b, t: (b, t, 0, 0)),
                pl.BlockSpec((1, 1, oc, 1), lambda b, t: (b, t, 0, 0)),
            ],
        ),
        compiler_params=pltpu.CompilerParams(
            dimension_semantics=("parallel", "parallel"),
            vmem_limit_bytes=vmem_limit,
        ),
        cost_estimate=pl.CostEstimate(
            flops=2 * n * hw_pad * k * oc + 5 * n * hw_pad * oc,
            transcendentals=0,
            bytes_accessed=n * k * hw_pad * 2 + oc * k * 2
            + n * oc * hw_pad * 2 + 4 * n * num_t * oc * 4,
        ),
    )(w_t, patches)

    # Chan-style combine of per-tile centered stats (numerically stable).
    tile_counts = jnp.minimum(thw, hw - jnp.arange(num_t) * thw)
    tile_counts = tile_counts.astype(jnp.float32).reshape(1, num_t, 1, 1)
    total_cnt = jnp.float32(n * hw)
    mean = jnp.sum(psum, axis=(0, 1)) / total_cnt                  # (OC, 1)
    tile_mean = psum / tile_counts
    between = jnp.sum(tile_counts * (tile_mean - mean) ** 2, axis=(0, 1))
    var = jnp.maximum((jnp.sum(pm2, axis=(0, 1)) + between) / total_cnt, 0.0)
    inv_std = lax.rsqrt(var + BN_EPS)
    scale = gamma_col * inv_std
    shift = beta_col - mean * scale

    out = pl.pallas_call(
        _bn_relu_kernel,
        out_shape=jax.ShapeDtypeStruct((n, oc, hw_pad), jnp.float32),
        grid_spec=pltpu.PrefetchScalarGridSpec(
            num_scalar_prefetch=0,
            grid=grid,
            in_specs=[
                pl.BlockSpec((oc, 1), lambda b, t: (0, 0)),
                pl.BlockSpec((oc, 1), lambda b, t: (0, 0)),
                pl.BlockSpec((1, oc, thw), lambda b, t: (b, 0, t)),
            ],
            out_specs=pl.BlockSpec((1, oc, thw), lambda b, t: (b, 0, t)),
        ),
        compiler_params=pltpu.CompilerParams(
            dimension_semantics=("parallel", "parallel"),
            vmem_limit_bytes=vmem_limit,
        ),
        cost_estimate=pl.CostEstimate(
            flops=3 * n * oc * hw_pad,
            transcendentals=0,
            bytes_accessed=n * oc * hw_pad * 2 + n * oc * hw_pad * 4
            + 2 * oc * 4,
        ),
    )(scale, shift, conv_out)

    # Crop HW padding, then contiguous reshape (no transpose needed).
    return out[:, :, :hw].reshape(n, oc, oh, ow)


def _reference(x, conv_w, conv_b, gamma, beta, stride, padding):
    """Plain-JAX reference (includes conv bias; training-mode BN cancels it)."""
    y = lax.conv_general_dilated(
        x,
        conv_w,
        window_strides=(stride, stride),
        padding=[(padding, padding), (padding, padding)],
        dimension_numbers=("NCHW", "OIHW", "NCHW"),
    ) + conv_b.reshape(1, -1, 1, 1)
    mean = jnp.mean(y, axis=(0, 2, 3), keepdims=True)
    var = jnp.mean((y - mean) ** 2, axis=(0, 2, 3), keepdims=True)
    yn = (y - mean) / jnp.sqrt(var + BN_EPS)
    yn = yn * gamma.reshape(1, -1, 1, 1) + beta.reshape(1, -1, 1, 1)
    return jnp.maximum(yn, 0.0)


if __name__ == "__main__":
    # Module config: ConvBatchNormRelu(in_channels=4, out_channels=8,
    #                                  kernel_size=3, stride, padding=1)
    N, C_IN, H, W = 2, 4, 16, 16
    C_OUT, KH, KW = 8, 3, 3

    key = jax.random.PRNGKey(0)
    kx, kw_, kb = jax.random.split(key, 3)

    x = jax.random.normal(kx, (N, C_IN, H, W), dtype=jnp.float32)
    fan_in = C_IN * KH * KW
    bound = 1.0 / (fan_in ** 0.5)
    conv_w = jax.random.uniform(
        kw_, (C_OUT, C_IN, KH, KW), minval=-bound, maxval=bound,
        dtype=jnp.float32)
    conv_b = jax.random.uniform(
        kb, (C_OUT,), minval=-bound, maxval=bound, dtype=jnp.float32)
    gamma = jnp.ones((C_OUT,), jnp.float32)   # BatchNorm2d default weight
    beta = jnp.zeros((C_OUT,), jnp.float32)   # BatchNorm2d default bias

    # bf16-quantized reference inputs (the kernels use bf16 MXU inputs with
    # f32 accumulation — explicit numerics contract).
    x_q = x.astype(jnp.bfloat16).astype(jnp.float32)
    w_q = conv_w.astype(jnp.bfloat16).astype(jnp.float32)

    # stride=1 exercises the fused single-kernel fast path;
    # stride=2 exercises the tiled two-pass path (incl. HW padding/masking).
    for stride, padding in ((1, 1), (2, 1)):
        out = conv_batchnorm_relu(
            x, conv_w, conv_b, gamma, beta, stride=stride, padding=padding)
        out = jax.block_until_ready(out)
        oh = (H + 2 * padding - KH) // stride + 1
        ow = (W + 2 * padding - KW) // stride + 1
        assert out.shape == (N, C_OUT, oh, ow)

        ref_q = _reference(x_q, w_q, conv_b, gamma, beta, stride, padding)
        assert jnp.allclose(out, ref_q, atol=2e-2, rtol=2e-2)

        ref_f32 = _reference(x, conv_w, conv_b, gamma, beta, stride, padding)
        assert jnp.allclose(out, ref_f32, atol=5e-2, rtol=5e-2)

    print("KERNEL_OK")
</pallas_src>

<mosaic_0001>
module attributes {stable_mosaic.version = 11 : i64} {
  func.func @kernel(%arg0: i32, %arg1: memref<2x4x326xbf16, #tpu.memory_space<vmem>>, %arg2: memref<3x3x8x4xbf16, #tpu.memory_space<vmem>>, %arg3: memref<8x1xf32, #tpu.memory_space<vmem>>, %arg4: memref<8x1xf32, #tpu.memory_space<vmem>>, %arg5: memref<1x288xf32, #tpu.memory_space<vmem>>, %arg6: memref<2x8x288xf32, #tpu.memory_space<vmem>>) attributes {dimension_semantics = [#tpu.dimension_semantics<arbitrary>], iteration_bounds = array<i64: 1>, scalar_prefetch = 0 : i64, scratch_operands = 0 : i64, tpu.core_type = #tpu.core_type<tc>, window_params = [{pipeline_mode = #tpu.pipeline_mode<synchronous>, transform_indices = @transform_0, window_bounds = array<i64: 2, 4, 326>}, {pipeline_mode = #tpu.pipeline_mode<synchronous>, transform_indices = @transform_1, window_bounds = array<i64: 3, 3, 8, 4>}, {pipeline_mode = #tpu.pipeline_mode<synchronous>, transform_indices = @transform_2, window_bounds = array<i64: 8, 1>}, {pipeline_mode = #tpu.pipeline_mode<synchronous>, transform_indices = @transform_3, window_bounds = array<i64: 8, 1>}, {pipeline_mode = #tpu.pipeline_mode<synchronous>, transform_indices = @transform_4, window_bounds = array<i64: 1, 288>}, {pipeline_mode = #tpu.pipeline_mode<synchronous>, transform_indices = @transform_5, window_bounds = array<i64: 2, 8, 288>}]} {
    %cst = arith.constant 0.000000e+00 : f32
    %0 = vector.broadcast %cst : f32 to vector<8x288xf32>
    %c0 = arith.constant 0 : index
    %c0_0 = arith.constant 0 : index
    %c0_1 = arith.constant 0 : index
    %1 = vector.load %arg1[%c0, %c0_0, %c0_1] : memref<2x4x326xbf16, #tpu.memory_space<vmem>>, vector<1x4x288xbf16>
    %2 = vector.shape_cast %1 : vector<1x4x288xbf16> to vector<4x288xbf16>
    %c0_2 = arith.constant 0 : index
    %c0_3 = arith.constant 0 : index
    %c0_4 = arith.constant 0 : index
    %c0_5 = arith.constant 0 : index
    %3 = vector.load %arg2[%c0_2, %c0_3, %c0_4, %c0_5] : memref<3x3x8x4xbf16, #tpu.memory_space<vmem>>, vector<1x1x8x4xbf16>
    %4 = vector.shape_cast %3 : vector<1x1x8x4xbf16> to vector<8x4xbf16>
    %cst_6 = arith.constant dense<0.000000e+00> : vector<8x288xf32>
    %5 = tpu.matmul %4, %2, %cst_6 {dimension_numbers = #tpu.dot_dimension_numbers<[1], [0], [0], [1], [0, 0, 1, 1], [], []>} : vector<8x4xbf16>, vector<4x288xbf16>, vector<8x288xf32> -> vector<8x288xf32>
    %6 = arith.addf %0, %5 : vector<8x288xf32>
    %c0_7 = arith.constant 0 : index
    %c0_8 = arith.constant 0 : index
    %c1 = arith.constant 1 : index
    %7 = vector.load %arg1[%c0_7, %c0_8, %c1] : memref<2x4x326xbf16, #tpu.memory_space<vmem>>, vector<1x4x288xbf16>
    %8 = vector.shape_cast %7 : vector<1x4x288xbf16> to vector<4x288xbf16>
    %c0_9 = arith.constant 0 : index
    %c1_10 = arith.constant 1 : index
    %c0_11 = arith.constant 0 : index
    %c0_12 = arith.constant 0 : index
    %9 = vector.load %arg2[%c0_9, %c1_10, %c0_11, %c0_12] : memref<3x3x8x4xbf16, #tpu.memory_space<vmem>>, vector<1x1x8x4xbf16>
    %10 = vector.shape_cast %9 : vector<1x1x8x4xbf16> to vector<8x4xbf16>
    %cst_13 = arith.constant dense<0.000000e+00> : vector<8x288xf32>
    %11 = tpu.matmul %10, %8, %cst_13 {dimension_numbers = #tpu.dot_dimension_numbers<[1], [0], [0], [1], [0, 0, 1, 1], [], []>} : vector<8x4xbf16>, vector<4x288xbf16>, vector<8x288xf32> -> vector<8x288xf32>
    %12 = arith.addf %6, %11 : vector<8x288xf32>
    %c0_14 = arith.constant 0 : index
    %c0_15 = arith.constant 0 : index
    %c2 = arith.constant 2 : index
    %13 = vector.load %arg1[%c0_14, %c0_15, %c2] : memref<2x4x326xbf16, #tpu.memory_space<vmem>>, vector<1x4x288xbf16>
    %14 = vector.shape_cast %13 : vector<1x4x288xbf16> to vector<4x288xbf16>
    %c0_16 = arith.constant 0 : index
    %c2_17 = arith.constant 2 : index
    %c0_18 = arith.constant 0 : index
    %c0_19 = arith.constant 0 : index
    %15 = vector.load %arg2[%c0_16, %c2_17, %c0_18, %c0_19] : memref<3x3x8x4xbf16, #tpu.memory_space<vmem>>, vector<1x1x8x4xbf16>
    %16 = vector.shape_cast %15 : vector<1x1x8x4xbf16> to vector<8x4xbf16>
    %cst_20 = arith.constant dense<0.000000e+00> : vector<8x288xf32>
    %17 = tpu.matmul %16, %14, %cst_20 {dimension_numbers = #tpu.dot_dimension_numbers<[1], [0], [0], [1], [0, 0, 1, 1], [], []>} : vector<8x4xbf16>, vector<4x288xbf16>, vector<8x288xf32> -> vector<8x288xf32>
    %18 = arith.addf %12, %17 : vector<8x288xf32>
    %c0_21 = arith.constant 0 : index
    %c0_22 = arith.constant 0 : index
    %c18 = arith.constant 18 : index
    %19 = vector.load %arg1[%c0_21, %c0_22, %c18] : memref<2x4x326xbf16, #tpu.memory_space<vmem>>, vector<1x4x288xbf16>
    %20 = vector.shape_cast %19 : vector<1x4x288xbf16> to vector<4x288xbf16>
    %c1_23 = arith.constant 1 : index
    %c0_24 = arith.constant 0 : index
    %c0_25 = arith.constant 0 : index
    %c0_26 = arith.constant 0 : index
    %21 = vector.load %arg2[%c1_23, %c0_24, %c0_25, %c0_26] : memref<3x3x8x4xbf16, #tpu.memory_space<vmem>>, vector<1x1x8x4xbf16>
    %22 = vector.shape_cast %21 : vector<1x1x8x4xbf16> to vector<8x4xbf16>
    %cst_27 = arith.constant dense<0.000000e+00> : vector<8x288xf32>
    %23 = tpu.matmul %22, %20, %cst_27 {dimension_numbers = #tpu.dot_dimension_numbers<[1], [0], [0], [1], [0, 0, 1, 1], [], []>} : vector<8x4xbf16>, vector<4x288xbf16>, vector<8x288xf32> -> vector<8x288xf32>
    %24 = arith.addf %18, %23 : vector<8x288xf32>
    %c0_28 = arith.constant 0 : index
    %c0_29 = arith.constant 0 : index
    %c19 = arith.constant 19 : index
    %25 = vector.load %arg1[%c0_28, %c0_29, %c19] : memref<2x4x326xbf16, #tpu.memory_space<vmem>>, vector<1x4x288xbf16>
    %26 = vector.shape_cast %25 : vector<1x4x288xbf16> to vector<4x288xbf16>
    %c1_30 = arith.constant 1 : index
    %c1_31 = arith.constant 1 : index
    %c0_32 = arith.constant 0 : index
    %c0_33 = arith.constant 0 : index
    %27 = vector.load %arg2[%c1_30, %c1_31, %c0_32, %c0_33] : memref<3x3x8x4xbf16, #tpu.memory_space<vmem>>, vector<1x1x8x4xbf16>
    %28 = vector.shape_cast %27 : vector<1x1x8x4xbf16> to vector<8x4xbf16>
    %cst_34 = arith.constant dense<0.000000e+00> : vector<8x288xf32>
    %29 = tpu.matmul %28, %26, %cst_34 {dimension_numbers = #tpu.dot_dimension_numbers<[1], [0], [0], [1], [0, 0, 1, 1], [], []>} : vector<8x4xbf16>, vector<4x288xbf16>, vector<8x288xf32> -> vector<8x288xf32>
    %30 = arith.addf %24, %29 : vector<8x288xf32>
    %c0_35 = arith.constant 0 : index
    %c0_36 = arith.constant 0 : index
    %c20 = arith.constant 20 : index
    %31 = vector.load %arg1[%c0_35, %c0_36, %c20] : memref<2x4x326xbf16, #tpu.memory_space<vmem>>, vector<1x4x288xbf16>
    %32 = vector.shape_cast %31 : vector<1x4x288xbf16> to vector<4x288xbf16>
    %c1_37 = arith.constant 1 : index
    %c2_38 = arith.constant 2 : index
    %c0_39 = arith.constant 0 : index
    %c0_40 = arith.constant 0 : index
    %33 = vector.load %arg2[%c1_37, %c2_38, %c0_39, %c0_40] : memref<3x3x8x4xbf16, #tpu.memory_space<vmem>>, vector<1x1x8x4xbf16>
    %34 = vector.shape_cast %33 : vector<1x1x8x4xbf16> to vector<8x4xbf16>
    %cst_41 = arith.constant dense<0.000000e+00> : vector<8x288xf32>
    %35 = tpu.matmul %34, %32, %cst_41 {dimension_numbers = #tpu.dot_dimension_numbers<[1], [0], [0], [1], [0, 0, 1, 1], [], []>} : vector<8x4xbf16>, vector<4x288xbf16>, vector<8x288xf32> -> vector<8x288xf32>
    %36 = arith.addf %30, %35 : vector<8x288xf32>
    %c0_42 = arith.constant 0 : index
    %c0_43 = arith.constant 0 : index
    %c36 = arith.constant 36 : index
    %37 = vector.load %arg1[%c0_42, %c0_43, %c36] : memref<2x4x326xbf16, #tpu.memory_space<vmem>>, vector<1x4x288xbf16>
    %38 = vector.shape_cast %37 : vector<1x4x288xbf16> to vector<4x288xbf16>
    %c2_44 = arith.constant 2 : index
    %c0_45 = arith.constant 0 : index
    %c0_46 = arith.constant 0 : index
    %c0_47 = arith.constant 0 : index
    %39 = vector.load %arg2[%c2_44, %c0_45, %c0_46, %c0_47] : memref<3x3x8x4xbf16, #tpu.memory_space<vmem>>, vector<1x1x8x4xbf16>
    %40 = vector.shape_cast %39 : vector<1x1x8x4xbf16> to vector<8x4xbf16>
    %cst_48 = arith.constant dense<0.000000e+00> : vector<8x288xf32>
    %41 = tpu.matmul %40, %38, %cst_48 {dimension_numbers = #tpu.dot_dimension_numbers<[1], [0], [0], [1], [0, 0, 1, 1], [], []>} : vector<8x4xbf16>, vector<4x288xbf16>, vector<8x288xf32> -> vector<8x288xf32>
    %42 = arith.addf %36, %41 : vector<8x288xf32>
    %c0_49 = arith.constant 0 : index
    %c0_50 = arith.constant 0 : index
    %c37 = arith.constant 37 : index
    %43 = vector.load %arg1[%c0_49, %c0_50, %c37] : memref<2x4x326xbf16, #tpu.memory_space<vmem>>, vector<1x4x288xbf16>
    %44 = vector.shape_cast %43 : vector<1x4x288xbf16> to vector<4x288xbf16>
    %c2_51 = arith.constant 2 : index
    %c1_52 = arith.constant 1 : index
    %c0_53 = arith.constant 0 : index
    %c0_54 = arith.constant 0 : index
    %45 = vector.load %arg2[%c2_51, %c1_52, %c0_53, %c0_54] : memref<3x3x8x4xbf16, #tpu.memory_space<vmem>>, vector<1x1x8x4xbf16>
    %46 = vector.shape_cast %45 : vector<1x1x8x4xbf16> to vector<8x4xbf16>
    %cst_55 = arith.constant dense<0.000000e+00> : vector<8x288xf32>
    %47 = tpu.matmul %46, %44, %cst_55 {dimension_numbers = #tpu.dot_dimension_numbers<[1], [0], [0], [1], [0, 0, 1, 1], [], []>} : vector<8x4xbf16>, vector<4x288xbf16>, vector<8x288xf32> -> vector<8x288xf32>
    %48 = arith.addf %42, %47 : vector<8x288xf32>
    %c0_56 = arith.constant 0 : index
    %c0_57 = arith.constant 0 : index
    %c38 = arith.constant 38 : index
    %49 = vector.load %arg1[%c0_56, %c0_57, %c38] : memref<2x4x326xbf16, #tpu.memory_space<vmem>>, vector<1x4x288xbf16>
    %50 = vector.shape_cast %49 : vector<1x4x288xbf16> to vector<4x288xbf16>
    %c2_58 = arith.constant 2 : index
    %c2_59 = arith.constant 2 : index
    %c0_60 = arith.constant 0 : index
    %c0_61 = arith.constant 0 : index
    %51 = vector.load %arg2[%c2_58, %c2_59, %c0_60, %c0_61] : memref<3x3x8x4xbf16, #tpu.memory_space<vmem>>, vector<1x1x8x4xbf16>
    %52 = vector.shape_cast %51 : vector<1x1x8x4xbf16> to vector<8x4xbf16>
    %cst_62 = arith.constant dense<0.000000e+00> : vector<8x288xf32>
    %53 = tpu.matmul %52, %50, %cst_62 {dimension_numbers = #tpu.dot_dimension_numbers<[1], [0], [0], [1], [0, 0, 1, 1], [], []>} : vector<8x4xbf16>, vector<4x288xbf16>, vector<8x288xf32> -> vector<8x288xf32>
    %54 = arith.addf %48, %53 : vector<8x288xf32>
    %cst_63 = arith.constant 0.000000e+00 : f32
    %55 = vector.broadcast %cst_63 : f32 to vector<8x288xf32>
    %c1_64 = arith.constant 1 : index
    %c0_65 = arith.constant 0 : index
    %c0_66 = arith.constant 0 : index
    %56 = vector.load %arg1[%c1_64, %c0_65, %c0_66] : memref<2x4x326xbf16, #tpu.memory_space<vmem>>, vector<1x4x288xbf16>
    %57 = vector.shape_cast %56 : vector<1x4x288xbf16> to vector<4x288xbf16>
    %c0_67 = arith.constant 0 : index
    %c0_68 = arith.constant 0 : index
    %c0_69 = arith.constant 0 : index
    %c0_70 = arith.constant 0 : index
    %58 = vector.load %arg2[%c0_67, %c0_68, %c0_69, %c0_70] : memref<3x3x8x4xbf16, #tpu.memory_space<vmem>>, vector<1x1x8x4xbf16>
    %59 = vector.shape_cast %58 : vector<1x1x8x4xbf16> to vector<8x4xbf16>
    %cst_71 = arith.constant dense<0.000000e+00> : vector<8x288xf32>
    %60 = tpu.matmul %59, %57, %cst_71 {dimension_numbers = #tpu.dot_dimension_numbers<[1], [0], [0], [1], [0, 0, 1, 1], [], []>} : vector<8x4xbf16>, vector<4x288xbf16>, vector<8x288xf32> -> vector<8x288xf32>
    %61 = arith.addf %55, %60 : vector<8x288xf32>
    %c1_72 = arith.constant 1 : index
    %c0_73 = arith.constant 0 : index
    %c1_74 = arith.constant 1 : index
    %62 = vector.load %arg1[%c1_72, %c0_73, %c1_74] : memref<2x4x326xbf16, #tpu.memory_space<vmem>>, vector<1x4x288xbf16>
    %63 = vector.shape_cast %62 : vector<1x4x288xbf16> to vector<4x288xbf16>
    %c0_75 = arith.constant 0 : index
    %c1_76 = arith.constant 1 : index
    %c0_77 = arith.constant 0 : index
    %c0_78 = arith.constant 0 : index
    %64 = vector.load %arg2[%c0_75, %c1_76, %c0_77, %c0_78] : memref<3x3x8x4xbf16, #tpu.memory_space<vmem>>, vector<1x1x8x4xbf16>
    %65 = vector.shape_cast %64 : vector<1x1x8x4xbf16> to vector<8x4xbf16>
    %cst_79 = arith.constant dense<0.000000e+00> : vector<8x288xf32>
    %66 = tpu.matmul %65, %63, %cst_79 {dimension_numbers = #tpu.dot_dimension_numbers<[1], [0], [0], [1], [0, 0, 1, 1], [], []>} : vector<8x4xbf16>, vector<4x288xbf16>, vector<8x288xf32> -> vector<8x288xf32>
    %67 = arith.addf %61, %66 : vector<8x288xf32>
    %c1_80 = arith.constant 1 : index
    %c0_81 = arith.constant 0 : index
    %c2_82 = arith.constant 2 : index
    %68 = vector.load %arg1[%c1_80, %c0_81, %c2_82] : memref<2x4x326xbf16, #tpu.memory_space<vmem>>, vector<1x4x288xbf16>
    %69 = vector.shape_cast %68 : vector<1x4x288xbf16> to vector<4x288xbf16>
    %c0_83 = arith.constant 0 : index
    %c2_84 = arith.constant 2 : index
    %c0_85 = arith.constant 0 : index
    %c0_86 = arith.constant 0 : index
    %70 = vector.load %arg2[%c0_83, %c2_84, %c0_85, %c0_86] : memref<3x3x8x4xbf16, #tpu.memory_space<vmem>>, vector<1x1x8x4xbf16>
    %71 = vector.shape_cast %70 : vector<1x1x8x4xbf16> to vector<8x4xbf16>
    %cst_87 = arith.constant dense<0.000000e+00> : vector<8x288xf32>
    %72 = tpu.matmul %71, %69, %cst_87 {dimension_numbers = #tpu.dot_dimension_numbers<[1], [0], [0], [1], [0, 0, 1, 1], [], []>} : vector<8x4xbf16>, vector<4x288xbf16>, vector<8x288xf32> -> vector<8x288xf32>
    %73 = arith.addf %67, %72 : vector<8x288xf32>
    %c1_88 = arith.constant 1 : index
    %c0_89 = arith.constant 0 : index
    %c18_90 = arith.constant 18 : index
    %74 = vector.load %arg1[%c1_88, %c0_89, %c18_90] : memref<2x4x326xbf16, #tpu.memory_space<vmem>>, vector<1x4x288xbf16>
    %75 = vector.shape_cast %74 : vector<1x4x288xbf16> to vector<4x288xbf16>
    %c1_91 = arith.constant 1 : index
    %c0_92 = arith.constant 0 : index
    %c0_93 = arith.constant 0 : index
    %c0_94 = arith.constant 0 : index
    %76 = vector.load %arg2[%c1_91, %c0_92, %c0_93, %c0_94] : memref<3x3x8x4xbf16, #tpu.memory_space<vmem>>, vector<1x1x8x4xbf16>
    %77 = vector.shape_cast %76 : vector<1x1x8x4xbf16> to vector<8x4xbf16>
    %cst_95 = arith.constant dense<0.000000e+00> : vector<8x288xf32>
    %78 = tpu.matmul %77, %75, %cst_95 {dimension_numbers = #tpu.dot_dimension_numbers<[1], [0], [0], [1], [0, 0, 1, 1], [], []>} : vector<8x4xbf16>, vector<4x288xbf16>, vector<8x288xf32> -> vector<8x288xf32>
    %79 = arith.addf %73, %78 : vector<8x288xf32>
    %c1_96 = arith.constant 1 : index
    %c0_97 = arith.constant 0 : index
    %c19_98 = arith.constant 19 : index
    %80 = vector.load %arg1[%c1_96, %c0_97, %c19_98] : memref<2x4x326xbf16, #tpu.memory_space<vmem>>, vector<1x4x288xbf16>
    %81 = vector.shape_cast %80 : vector<1x4x288xbf16> to vector<4x288xbf16>
    %c1_99 = arith.constant 1 : index
    %c1_100 = arith.constant 1 : index
    %c0_101 = arith.constant 0 : index
    %c0_102 = arith.constant 0 : index
    %82 = vector.load %arg2[%c1_99, %c1_100, %c0_101, %c0_102] : memref<3x3x8x4xbf16, #tpu.memory_space<vmem>>, vector<1x1x8x4xbf16>
    %83 = vector.shape_cast %82 : vector<1x1x8x4xbf16> to vector<8x4xbf16>
    %cst_103 = arith.constant dense<0.000000e+00> : vector<8x288xf32>
    %84 = tpu.matmul %83, %81, %cst_103 {dimension_numbers = #tpu.dot_dimension_numbers<[1], [0], [0], [1], [0, 0, 1, 1], [], []>} : vector<8x4xbf16>, vector<4x288xbf16>, vector<8x288xf32> -> vector<8x288xf32>
    %85 = arith.addf %79, %84 : vector<8x288xf32>
    %c1_104 = arith.constant 1 : index
    %c0_105 = arith.constant 0 : index
    %c20_106 = arith.constant 20 : index
    %86 = vector.load %arg1[%c1_104, %c0_105, %c20_106] : memref<2x4x326xbf16, #tpu.memory_space<vmem>>, vector<1x4x288xbf16>
    %87 = vector.shape_cast %86 : vector<1x4x288xbf16> to vector<4x288xbf16>
    %c1_107 = arith.constant 1 : index
    %c2_108 = arith.constant 2 : index
    %c0_109 = arith.constant 0 : index
    %c0_110 = arith.constant 0 : index
    %88 = vector.load %arg2[%c1_107, %c2_108, %c0_109, %c0_110] : memref<3x3x8x4xbf16, #tpu.memory_space<vmem>>, vector<1x1x8x4xbf16>
    %89 = vector.shape_cast %88 : vector<1x1x8x4xbf16> to vector<8x4xbf16>
    %cst_111 = arith.constant dense<0.000000e+00> : vector<8x288xf32>
    %90 = tpu.matmul %89, %87, %cst_111 {dimension_numbers = #tpu.dot_dimension_numbers<[1], [0], [0], [1], [0, 0, 1, 1], [], []>} : vector<8x4xbf16>, vector<4x288xbf16>, vector<8x288xf32> -> vector<8x288xf32>
    %91 = arith.addf %85, %90 : vector<8x288xf32>
    %c1_112 = arith.constant 1 : index
    %c0_113 = arith.constant 0 : index
    %c36_114 = arith.constant 36 : index
    %92 = vector.load %arg1[%c1_112, %c0_113, %c36_114] : memref<2x4x326xbf16, #tpu.memory_space<vmem>>, vector<1x4x288xbf16>
    %93 = vector.shape_cast %92 : vector<1x4x288xbf16> to vector<4x288xbf16>
    %c2_115 = arith.constant 2 : index
    %c0_116 = arith.constant 0 : index
    %c0_117 = arith.constant 0 : index
    %c0_118 = arith.constant 0 : index
    %94 = vector.load %arg2[%c2_115, %c0_116, %c0_117, %c0_118] : memref<3x3x8x4xbf16, #tpu.memory_space<vmem>>, vector<1x1x8x4xbf16>
    %95 = vector.shape_cast %94 : vector<1x1x8x4xbf16> to vector<8x4xbf16>
    %cst_119 = arith.constant dense<0.000000e+00> : vector<8x288xf32>
    %96 = tpu.matmul %95, %93, %cst_119 {dimension_numbers = #tpu.dot_dimension_numbers<[1], [0], [0], [1], [0, 0, 1, 1], [], []>} : vector<8x4xbf16>, vector<4x288xbf16>, vector<8x288xf32> -> vector<8x288xf32>
    %97 = arith.addf %91, %96 : vector<8x288xf32>
    %c1_120 = arith.constant 1 : index
    %c0_121 = arith.constant 0 : index
    %c37_122 = arith.constant 37 : index
    %98 = vector.load %arg1[%c1_120, %c0_121, %c37_122] : memref<2x4x326xbf16, #tpu.memory_space<vmem>>, vector<1x4x288xbf16>
    %99 = vector.shape_cast %98 : vector<1x4x288xbf16> to vector<4x288xbf16>
    %c2_123 = arith.constant 2 : index
    %c1_124 = arith.constant 1 : index
    %c0_125 = arith.constant 0 : index
    %c0_126 = arith.constant 0 : index
    %100 = vector.load %arg2[%c2_123, %c1_124, %c0_125, %c0_126] : memref<3x3x8x4xbf16, #tpu.memory_space<vmem>>, vector<1x1x8x4xbf16>
    %101 = vector.shape_cast %100 : vector<1x1x8x4xbf16> to vector<8x4xbf16>
    %cst_127 = arith.constant dense<0.000000e+00> : vector<8x288xf32>
    %102 = tpu.matmul %101, %99, %cst_127 {dimension_numbers = #tpu.dot_dimension_numbers<[1], [0], [0], [1], [0, 0, 1, 1], [], []>} : vector<8x4xbf16>, vector<4x288xbf16>, vector<8x288xf32> -> vector<8x288xf32>
    %103 = arith.addf %97, %102 : vector<8x288xf32>
    %c1_128 = arith.constant 1 : index
    %c0_129 = arith.constant 0 : index
    %c38_130 = arith.constant 38 : index
    %104 = vector.load %arg1[%c1_128, %c0_129, %c38_130] : memref<2x4x326xbf16, #tpu.memory_space<vmem>>, vector<1x4x288xbf16>
    %105 = vector.shape_cast %104 : vector<1x4x288xbf16> to vector<4x288xbf16>
    %c2_131 = arith.constant 2 : index
    %c2_132 = arith.constant 2 : index
    %c0_133 = arith.constant 0 : index
    %c0_134 = arith.constant 0 : index
    %106 = vector.load %arg2[%c2_131, %c2_132, %c0_133, %c0_134] : memref<3x3x8x4xbf16, #tpu.memory_space<vmem>>, vector<1x1x8x4xbf16>
    %107 = vector.shape_cast %106 : vector<1x1x8x4xbf16> to vector<8x4xbf16>
    %cst_135 = arith.constant dense<0.000000e+00> : vector<8x288xf32>
    %108 = tpu.matmul %107, %105, %cst_135 {dimension_numbers = #tpu.dot_dimension_numbers<[1], [0], [0], [1], [0, 0, 1, 1], [], []>} : vector<8x4xbf16>, vector<4x288xbf16>, vector<8x288xf32> -> vector<8x288xf32>
    %109 = arith.addf %103, %108 : vector<8x288xf32>
    %c0_136 = arith.constant 0 : index
    %c0_137 = arith.constant 0 : index
    %110 = vector.load %arg5[%c0_136, %c0_137] : memref<1x288xf32, #tpu.memory_space<vmem>>, vector<1x288xf32>
    %111 = vector.broadcast %110 : vector<1x288xf32> to vector<8x288xf32>
    %112 = arith.mulf %54, %111 : vector<8x288xf32>
    %cst_138 = arith.constant dense<0.000000e+00> : vector<8xf32>
    %113 = vector.multi_reduction <add>, %112, %cst_138 [1] : vector<8x288xf32> to vector<8xf32>
    %114 = vector.shape_cast %113 : vector<8xf32> to vector<8x1xf32>
    %cst_139 = arith.constant 0.000000e+00 : f32
    %115 = vector.broadcast %cst_139 : f32 to vector<8x1xf32>
    %116 = arith.addf %115, %114 : vector<8x1xf32>
    %117 = vector.broadcast %110 : vector<1x288xf32> to vector<8x288xf32>
    %118 = arith.mulf %109, %117 : vector<8x288xf32>
    %cst_140 = arith.constant dense<0.000000e+00> : vector<8xf32>
    %119 = vector.multi_reduction <add>, %118, %cst_140 [1] : vector<8x288xf32> to vector<8xf32>
    %120 = vector.shape_cast %119 : vector<8xf32> to vector<8x1xf32>
    %121 = arith.addf %116, %120 : vector<8x1xf32>
    %cst_141 = arith.constant 5.120000e+02 : f32
    %122 = vector.broadcast %cst_141 : f32 to vector<8x1xf32>
    %123 = arith.divf %121, %122 : vector<8x1xf32>
    %124 = vector.broadcast %123 : vector<8x1xf32> to vector<8x288xf32>
    %125 = arith.subf %54, %124 : vector<8x288xf32>
    %126 = arith.mulf %125, %125 : vector<8x288xf32>
    %127 = vector.broadcast %110 : vector<1x288xf32> to vector<8x288xf32>
    %128 = arith.mulf %127, %126 : vector<8x288xf32>
    %cst_142 = arith.constant dense<0.000000e+00> : vector<8xf32>
    %129 = vector.multi_reduction <add>, %128, %cst_142 [1] : vector<8x288xf32> to vector<8xf32>
    %130 = vector.shape_cast %129 : vector<8xf32> to vector<8x1xf32>
    %cst_143 = arith.constant 0.000000e+00 : f32
    %131 = vector.broadcast %cst_143 : f32 to vector<8x1xf32>
    %132 = arith.addf %131, %130 : vector<8x1xf32>
    %133 = vector.broadcast %123 : vector<8x1xf32> to vector<8x288xf32>
    %134 = arith.subf %109, %133 : vector<8x288xf32>
    %135 = arith.mulf %134, %134 : vector<8x288xf32>
    %136 = vector.broadcast %110 : vector<1x288xf32> to vector<8x288xf32>
    %137 = arith.mulf %136, %135 : vector<8x288xf32>
    %cst_144 = arith.constant dense<0.000000e+00> : vector<8xf32>
    %138 = vector.multi_reduction <add>, %137, %cst_144 [1] : vector<8x288xf32> to vector<8xf32>
    %139 = vector.shape_cast %138 : vector<8xf32> to vector<8x1xf32>
    %140 = arith.addf %132, %139 : vector<8x1xf32>
    %cst_145 = arith.constant 5.120000e+02 : f32
    %141 = vector.broadcast %cst_145 : f32 to vector<8x1xf32>
    %142 = arith.divf %140, %141 : vector<8x1xf32>
    %cst_146 = arith.constant 9.99999974E-6 : f32
    %143 = vector.broadcast %cst_146 : f32 to vector<8x1xf32>
    %144 = arith.addf %142, %143 : vector<8x1xf32>
    %145 = math.rsqrt %144 : vector<8x1xf32>
    %c0_147 = arith.constant 0 : index
    %c0_148 = arith.constant 0 : index
    %146 = vector.load %arg3[%c0_147, %c0_148] : memref<8x1xf32, #tpu.memory_space<vmem>>, vector<8x1xf32>
    %147 = arith.mulf %146, %145 : vector<8x1xf32>
    %c0_149 = arith.constant 0 : index
    %c0_150 = arith.constant 0 : index
    %148 = vector.load %arg4[%c0_149, %c0_150] : memref<8x1xf32, #tpu.memory_space<vmem>>, vector<8x1xf32>
    %149 = arith.mulf %123, %147 : vector<8x1xf32>
    %150 = arith.subf %148, %149 : vector<8x1xf32>
    %151 = vector.broadcast %147 : vector<8x1xf32> to vector<8x288xf32>
    %152 = arith.mulf %54, %151 : vector<8x288xf32>
    %153 = vector.broadcast %150 : vector<8x1xf32> to vector<8x288xf32>
    %154 = arith.addf %152, %153 : vector<8x288xf32>
    %cst_151 = arith.constant 0.000000e+00 : f32
    %155 = vector.broadcast %cst_151 : f32 to vector<8x288xf32>
    %156 = arith.maximumf %154, %155 : vector<8x288xf32>
    %c0_152 = arith.constant 0 : index
    %c0_153 = arith.constant 0 : index
    %c0_154 = arith.constant 0 : index
    %157 = vector.load %arg6[%c0_152, %c0_153, %c0_154] : memref<2x8x288xf32, #tpu.memory_space<vmem>>, vector<1x8x288xf32>
    %158 = vector.shape_cast %157 : vector<1x8x288xf32> to vector<8x288xf32>
    %159 = vector.shape_cast %156 : vector<8x288xf32> to vector<1x8x288xf32>
    tpu.vector_store %arg6[%c0_152, %c0_153, %c0_154], %159 {strides = array<i32>} : memref<2x8x288xf32, #tpu.memory_space<vmem>>, vector<1x8x288xf32>,
    %160 = vector.broadcast %147 : vector<8x1xf32> to vector<8x288xf32>
    %161 = arith.mulf %109, %160 : vector<8x288xf32>
    %162 = vector.broadcast %150 : vector<8x1xf32> to vector<8x288xf32>
    %163 = arith.addf %161, %162 : vector<8x288xf32>
    %cst_155 = arith.constant 0.000000e+00 : f32
    %164 = vector.broadcast %cst_155 : f32 to vector<8x288xf32>
    %165 = arith.maximumf %163, %164 : vector<8x288xf32>
    %c1_156 = arith.constant 1 : index
    %c0_157 = arith.constant 0 : index
    %c0_158 = arith.constant 0 : index
    %166 = vector.load %arg6[%c1_156, %c0_157, %c0_158] : memref<2x8x288xf32, #tpu.memory_space<vmem>>, vector<1x8x288xf32>
    %167 = vector.shape_cast %166 : vector<1x8x288xf32> to vector<8x288xf32>
    %168 = vector.shape_cast %165 : vector<8x288xf32> to vector<1x8x288xf32>
    tpu.vector_store %arg6[%c1_156, %c0_157, %c0_158], %168 {strides = array<i32>} : memref<2x8x288xf32, #tpu.memory_space<vmem>>, vector<1x8x288xf32>,
    return
  }
  func.func @transform_0(%arg0: i32) -> (i32, i32, i32) {
    %c0_i32 = arith.constant 0 : i32
    %c0_i32_0 = arith.constant 0 : i32
    %c0_i32_1 = arith.constant 0 : i32
    %c0_i32_2 = arith.constant 0 : i32
    return %c0_i32, %c0_i32_0, %c0_i32_1 : i32, i32, i32
  }
  func.func @transform_1(%arg0: i32) -> (i32, i32, i32, i32) {
    %c0_i32 = arith.constant 0 : i32
    %c0_i32_0 = arith.constant 0 : i32
    %c0_i32_1 = arith.constant 0 : i32
    %c0_i32_2 = arith.constant 0 : i32
    %c0_i32_3 = arith.constant 0 : i32
    return %c0_i32, %c0_i32_0, %c0_i32_1, %c0_i32_2 : i32, i32, i32, i32
  }
  func.func @transform_2(%arg0: i32) -> (i32, i32) {
    %c0_i32 = arith.constant 0 : i32
    %c0_i32_0 = arith.constant 0 : i32
    %c0_i32_1 = arith.constant 0 : i32
    return %c0_i32, %c0_i32_0 : i32, i32
  }
  func.func @transform_3(%arg0: i32) -> (i32, i32) {
    %c0_i32 = arith.constant 0 : i32
    %c0_i32_0 = arith.constant 0 : i32
    %c0_i32_1 = arith.constant 0 : i32
    return %c0_i32, %c0_i32_0 : i32, i32
  }
  func.func @transform_4(%arg0: i32) -> (i32, i32) {
    %c0_i32 = arith.constant 0 : i32
    %c0_i32_0 = arith.constant 0 : i32
    %c0_i32_1 = arith.constant 0 : i32
    return %c0_i32, %c0_i32_0 : i32, i32
  }
  func.func @transform_5(%arg0: i32) -> (i32, i32, i32) {
    %c0_i32 = arith.constant 0 : i32
    %c0_i32_0 = arith.constant 0 : i32
    %c0_i32_1 = arith.constant 0 : i32
    %c0_i32_2 = arith.constant 0 : i32
    return %c0_i32, %c0_i32_0, %c0_i32_1 : i32, i32, i32
  }
}

</mosaic_0001>

<llo_original>
// kernel: conv_batchnorm_relu.1
$region0: #{conv_batchnorm_relu.1}
  #allocation0 [shape = 'u32[]', space=smem, size = 0x4, offset = 0x4, fixed_abs, tag = 'smem constant byte address 0x4 - core index']
  #allocation1 [shape = 'u32[144,128]{1,0:T(1,128)}', space=vmem, size = 0x12000, scoped, tag = 'internal scratch']
  %s0 = inlined_call_operand.vmem [shape: bf16[2,4,326], index: 0, kind: input, shape index: {}]
  %s1 = inlined_call_operand.vmem [shape: bf16[3,3,8,4], index: 1, kind: input, shape index: {}]
  %s2 = inlined_call_operand.vmem [shape: f32[8,1], index: 2, kind: input, shape index: {}]
  %s3 = inlined_call_operand.vmem [shape: f32[8,1], index: 3, kind: input, shape index: {}]
  %s4 = inlined_call_operand.vmem [shape: f32[1,288], index: 4, kind: input, shape index: {}]
  %s5 = inlined_call_operand.vmem [shape: f32[2,8,288], index: 5, kind: output, shape index: {}]
  %s6 = sld [smem:[#allocation0]]
  $region30: #{conv_batchnorm_relu.1} parent=0
    _
  %s8 = ssub.s32 1, %s6
  %s9 = scalar_select 0, %s8, %s6
  // Predicated region
  $region2: #{conv_batchnorm_relu.1} parent=0 // pred_check
    _
  $region3: #{conv_batchnorm_relu.1} parent=0 // pred_check_branch
    %11 = sbr.rel (0) target = $region5
  $region4: #{conv_batchnorm_relu.1} parent=0 // pred_region
    _
  $region5: #{conv_batchnorm_relu.1} parent=0 // pred_fallthru
    _
  // Predicated region
  $region6: #{conv_batchnorm_relu.1} parent=0 // pred_check
    _
  $region7: #{conv_batchnorm_relu.1} parent=0 // pred_check_branch
    %13 = sbr.rel (0) target = $region9
  $region8: #{conv_batchnorm_relu.1} parent=0 // pred_region
    _
  $region9: #{conv_batchnorm_relu.1} parent=0 // pred_fallthru
    _
  // Predicated region
  $region10: #{conv_batchnorm_relu.1} parent=0 // pred_check
    _
  $region11: #{conv_batchnorm_relu.1} parent=0 // pred_check_branch
    %15 = sbr.rel (0) target = $region13
  $region12: #{conv_batchnorm_relu.1} parent=0 // pred_region
    _
  $region13: #{conv_batchnorm_relu.1} parent=0 // pred_fallthru
    _
  // Predicated region
  $region14: #{conv_batchnorm_relu.1} parent=0 // pred_check
    _
  $region15: #{conv_batchnorm_relu.1} parent=0 // pred_check_branch
    %17 = sbr.rel (0) target = $region17
  $region16: #{conv_batchnorm_relu.1} parent=0 // pred_region
    _
  $region17: #{conv_batchnorm_relu.1} parent=0 // pred_fallthru
    _
  // Predicated region
  $region18: #{conv_batchnorm_relu.1} parent=0 // pred_check
    _
  $region19: #{conv_batchnorm_relu.1} parent=0 // pred_check_branch
    %19 = sbr.rel (0) target = $region21
  $region20: #{conv_batchnorm_relu.1} parent=0 // pred_region
    _
  $region21: #{conv_batchnorm_relu.1} parent=0 // pred_fallthru
    _
  %v21 = vld [vmem:[%s0] sm:$0x3f]
  %v22 = vld [vmem:[%s1] sm:$0xf]
  %s23 = scalar_lea.vmem %s1, 4
  %v24 = vld [vmem:[%s23] sm:$0xf]
  %v26 = vcombine.high %v21, %v21
  %v28 = vunpack.c.l.s4 1983009808
  %v29 = vunpack.c.0.s8 %v28
  %v30 = vlaneseq
  %v31 = vshrl.u32 %v30, 7
  %v32 = vsub.s32 %v29, %v31
  %v33 = vrot.slane %v21, %v32
  %v35 = vunpack.c.l.s4 1983009808
  %v36 = vunpack.c.0.s8 %v35
  %v37 = vlaneseq
  %v38 = vshrl.u32 %v37, 7
  %v39 = vsub.s32 %v36, %v38
  %v40 = vrot.slane %v26, %v39
  %v41 = vcombine.high %v33, %v33
  %42 = vrot.lane.b32.xlu0 %v33, 127
  %v43 = vpop.permute.xlu0 %42
  %44 = vrot.lane.b32.xlu0 %v41, 127
  %v45 = vpop.permute.xlu0 %44
  %46 = vrot.lane.b32.xlu0 %v40, 127
  %v47 = vpop.permute.xlu0 %46
  %vm48 = vcmask 1039360
  %v49 = vsel %vm48, %v43, %v45
  %v50 = vsel %vm48, %v45, %v47
  %vm51 = vcmask 31744
  %v53 = vsel %vm51, %v24, 0
  %vm55 = vcmask 1041408
  %v57 = vsel %vm55, %v49, 0
  %v60 = vsel %vm55, %v50, 0
  %v63 = vsel %vm55, %v47, 0
  %65 = vmatprep.subr.bf16.mxu0 0
  %66 = vmatpush1.bf16.msra.mxu0 0
  %67 = vmatprep.subr.bf16.mxu0 0
  %68 = vmatpush1.bf16.msra.mxu0 0
  %69 = vmatprep.subr.bf16.mxu0 0
  %70 = vmatpush1.bf16.msra.mxu0 0
  %71 = vmatprep.subr.bf16.mxu0 0
  %72 = vmatpush1.bf16.msra.mxu0 0
  %73 = vmatprep.subr.bf16.mxu0 0
  %74 = vmatpush1.bf16.msra.mxu0 0
  %75 = vmatprep.subr.bf16.mxu0 0
  %76 = vmatpush1.bf16.msra.mxu0 0
  %77 = vmatprep.subr.bf16.mxu0 0
  %78 = vmatpush1.bf16.msra.mxu0 0
  %79 = vmatprep.subr.bf16.mxu0 %v60
  %80 = vmatpush1.bf16.msra.mxu0 %v57
  %81 = vmatprep.subr.bf16.mxu0 0
  %82 = vmatpush2.bf16.msra.mxu0 0
  %83 = vmatprep.subr.bf16.mxu0 0
  %84 = vmatpush2.bf16.msra.mxu0 0
  %85 = vmatprep.subr.bf16.mxu0 0
  %86 = vmatpush2.bf16.msra.mxu0 0
  %87 = vmatprep.subr.bf16.mxu0 0
  %88 = vmatpush2.bf16.msra.mxu0 0
  %89 = vmatprep.subr.bf16.mxu0 0
  %90 = vmatpush2.bf16.msra.mxu0 0
  %91 = vmatprep.subr.bf16.mxu0 0
  %92 = vmatpush2.bf16.msra.mxu0 0
  %93 = vmatprep.subr.bf16.mxu0 0
  %94 = vmatpush2.bf16.msra.mxu0 0
  %95 = vmatprep.subr.bf16.mxu0 0
  %96 = vmatpush2.bf16.msra.mxu0 0
  %97 = vmatprep.mubr.bf16.mxu0 0
  %98 = vmatmul.mubr.bf16.gmra.mxu0 %v53
  %v99 = vpop.f32.mrf.mxu0
  %v100 = vadd.f32 0.0, %v99
  %v101 = vpop.f32.mrf.mxu0
  %v102 = vadd.f32 0.0, %v101
  %v103 = vpop.f32.mrf.mxu0
  %v104 = vpop.f32.mrf.mxu0
  %105 = vdwg.mxu0
  %106 = vmatprep.subr.bf16.mxu0 0
  %107 = vmatpush1.bf16.msra.mxu0 0
  %108 = vmatprep.subr.bf16.mxu0 0
  %109 = vmatpush1.bf16.msra.mxu0 0
  %110 = vmatprep.subr.bf16.mxu0 0
  %111 = vmatpush1.bf16.msra.mxu0 0
  %112 = vmatprep.subr.bf16.mxu0 0
  %113 = vmatpush1.bf16.msra.mxu0 0
  %114 = vmatprep.subr.bf16.mxu0 0
  %115 = vmatpush1.bf16.msra.mxu0 0
  %116 = vmatprep.subr.bf16.mxu0 0
  %117 = vmatpush1.bf16.msra.mxu0 0
  %118 = vmatprep.subr.bf16.mxu0 0
  %119 = vmatpush1.bf16.msra.mxu0 0
  %120 = vmatprep.subr.bf16.mxu0 0
  %121 = vmatpush1.bf16.msra.mxu0 %v63
  %122 = vmatprep.subr.bf16.mxu0 0
  %123 = vmatpush2.bf16.msra.mxu0 0
  %124 = vmatprep.subr.bf16.mxu0 0
  %125 = vmatpush2.bf16.msra.mxu0 0
  %126 = vmatprep.subr.bf16.mxu0 0
  %127 = vmatpush2.bf16.msra.mxu0 0
  %128 = vmatprep.subr.bf16.mxu0 0
  %129 = vmatpush2.bf16.msra.mxu0 0
  %130 = vmatprep.subr.bf16.mxu0 0
  %131 = vmatpush2.bf16.msra.mxu0 0
  %132 = vmatprep.subr.bf16.mxu0 0
  %133 = vmatpush2.bf16.msra.mxu0 0
  %134 = vmatprep.subr.bf16.mxu0 0
  %135 = vmatpush2.bf16.msra.mxu0 0
  %136 = vmatprep.subr.bf16.mxu0 0
  %137 = vmatpush2.bf16.msra.mxu0 0
  %138 = vmatprep.mubr.bf16.mxu0 0
  %139 = vmatmul.mubr.bf16.gmra.mxu0 %v53
  %v140 = vpop.f32.mrf.mxu0
  %v141 = vadd.f32 0.0, %v140
  %v142 = vpop.f32.mrf.mxu0
  %v143 = vpop.f32.mrf.mxu0
  %v144 = vpop.f32.mrf.mxu0
  %145 = vdwg.mxu0
  %v147 = vsel %vm51, %v22, 0
  %v150 = vsel %vm55, %v33, 0
  %v153 = vsel %vm55, %v41, 0
  %v156 = vsel %vm55, %v40, 0
  %158 = vmatprep.subr.bf16.mxu0 0
  %159 = vmatpush1.bf16.msra.mxu0 0
  %160 = vmatprep.subr.bf16.mxu0 0
  %161 = vmatpush1.bf16.msra.mxu0 0
  %162 = vmatprep.subr.bf16.mxu0 0
  %163 = vmatpush1.bf16.msra.mxu0 0
  %164 = vmatprep.subr.bf16.mxu0 0
  %165 = vmatpush1.bf16.msra.mxu0 0
  %166 = vmatprep.subr.bf16.mxu0 0
  %167 = vmatpush1.bf16.msra.mxu0 0
  %168 = vmatprep.subr.bf16.mxu0 0
  %169 = vmatpush1.bf16.msra.mxu0 0
  %170 = vmatprep.subr.bf16.mxu0 0
  %171 = vmatpush1.bf16.msra.mxu0 0
  %172 = vmatprep.subr.bf16.mxu0 %v153
  %173 = vmatpush1.bf16.msra.mxu0 %v150
  %174 = vmatprep.subr.bf16.mxu0 0
  %175 = vmatpush2.bf16.msra.mxu0 0
  %176 = vmatprep.subr.bf16.mxu0 0
  %177 = vmatpush2.bf16.msra.mxu0 0
  %178 = vmatprep.subr.bf16.mxu0 0
  %179 = vmatpush2.bf16.msra.mxu0 0
  %180 = vmatprep.subr.bf16.mxu0 0
  %181 = vmatpush2.bf16.msra.mxu0 0
  %182 = vmatprep.subr.bf16.mxu0 0
  %183 = vmatpush2.bf16.msra.mxu0 0
  %184 = vmatprep.subr.bf16.mxu0 0
  %185 = vmatpush2.bf16.msra.mxu0 0
  %186 = vmatprep.subr.bf16.mxu0 0
  %187 = vmatpush2.bf16.msra.mxu0 0
  %188 = vmatprep.subr.bf16.mxu0 0
  %189 = vmatpush2.bf16.msra.mxu0 0
  %190 = vmatprep.mubr.bf16.mxu0 0
  %191 = vmatmul.mubr.bf16.gmra.mxu0 %v147
  %v192 = vpop.f32.mrf.mxu0
  %v193 = vadd.f32 %v100, %v192
  %v194 = vpop.f32.mrf.mxu0
  %v195 = vadd.f32 %v102, %v194
  %v196 = vpop.f32.mrf.mxu0
  %v197 = vpop.f32.mrf.mxu0
  %198 = vdwg.mxu0
  %199 = vmatprep.subr.bf16.mxu0 0
  %200 = vmatpush1.bf16.msra.mxu0 0
  %201 = vmatprep.subr.bf16.mxu0 0
  %202 = vmatpush1.bf16.msra.mxu0 0
  %203 = vmatprep.subr.bf16.mxu0 0
  %204 = vmatpush1.bf16.msra.mxu0 0
  %205 = vmatprep.subr.bf16.mxu0 0
  %206 = vmatpush1.bf16.msra.mxu0 0
  %207 = vmatprep.subr.bf16.mxu0 0
  %208 = vmatpush1.bf16.msra.mxu0 0
  %209 = vmatprep.subr.bf16.mxu0 0
  %210 = vmatpush1.bf16.msra.mxu0 0
  %211 = vmatprep.subr.bf16.mxu0 0
  %212 = vmatpush1.bf16.msra.mxu0 0
  %213 = vmatprep.subr.bf16.mxu0 0
  %214 = vmatpush1.bf16.msra.mxu0 %v156
  %215 = vmatprep.subr.bf16.mxu0 0
  %216 = vmatpush2.bf16.msra.mxu0 0
  %217 = vmatprep.subr.bf16.mxu0 0
  %218 = vmatpush2.bf16.msra.mxu0 0
  %219 = vmatprep.subr.bf16.mxu0 0
  %220 = vmatpush2.bf16.msra.mxu0 0
  %221 = vmatprep.subr.bf16.mxu0 0
  %222 = vmatpush2.bf16.msra.mxu0 0
  %223 = vmatprep.subr.bf16.mxu0 0
  %224 = vmatpush2.bf16.msra.mxu0 0
  %225 = vmatprep.subr.bf16.mxu0 0
  %226 = vmatpush2.bf16.msra.mxu0 0
  %227 = vmatprep.subr.bf16.mxu0 0
  %228 = vmatpush2.bf16.msra.mxu0 0
  %229 = vmatprep.subr.bf16.mxu0 0
  %230 = vmatpush2.bf16.msra.mxu0 0
  %231 = vmatprep.mubr.bf16.mxu0 0
  %232 = vmatmul.mubr.bf16.gmra.mxu0 %v147
  %v233 = vpop.f32.mrf.mxu0
  %v234 = vadd.f32 %v141, %v233
  %v235 = vpop.f32.mrf.mxu0
  %v236 = vpop.f32.mrf.mxu0
  %v237 = vpop.f32.mrf.mxu0
  %238 = vdwg.mxu0
  %v239 = vld [vmem:[%s0] sm:$0x3f]
  %s240 = scalar_lea.vmem %s1, 8
  %v241 = vld [vmem:[%s240] sm:$0xf]
  %v243 = vcombine.high %v239, %v239
  %v245 = vunpack.c.l.s4 1983009808
  %v246 = vunpack.c.0.s8 %v245
  %v247 = vlaneseq
  %v248 = vshrl.u32 %v247, 7
  %v249 = vsub.s32 %v246, %v248
  %v250 = vrot.slane %v239, %v249
  %v252 = vunpack.c.l.s4 1983009808
  %v253 = vunpack.c.0.s8 %v252
  %v254 = vlaneseq
  %v255 = vshrl.u32 %v254, 7
  %v256 = vsub.s32 %v253, %v255
  %v257 = vrot.slane %v243, %v256
  %v258 = vcombine.high %v250, %v250
  %259 = vrot.lane.b32.xlu0 %v250, 126
  %v260 = vpop.permute.xlu0 %259
  %261 = vrot.lane.b32.xlu0 %v258, 126
  %v262 = vpop.permute.xlu0 %261
  %263 = vrot.lane.b32.xlu0 %v257, 126
  %v264 = vpop.permute.xlu0 %263
  %vm265 = vcmask 1031168
  %v266 = vsel %vm265, %v260, %v262
  %v267 = vsel %vm265, %v262, %v264
  %v269 = vsel %vm51, %v241, 0
  %v272 = vsel %vm55, %v266, 0
  %v275 = vsel %vm55, %v267, 0
  %v278 = vsel %vm55, %v264, 0
  %280 = vmatprep.subr.bf16.mxu0 0
  %281 = vmatpush1.bf16.msra.mxu0 0
  %282 = vmatprep.subr.bf16.mxu0 0
  %283 = vmatpush1.bf16.msra.mxu0 0
  %284 = vmatprep.subr.bf16.mxu0 0
  %285 = vmatpush1.bf16.msra.mxu0 0
  %286 = vmatprep.subr.bf16.mxu0 0
  %287 = vmatpush1.bf16.msra.mxu0 0
  %288 = vmatprep.subr.bf16.mxu0 0
  %289 = vmatpush1.bf16.msra.mxu0 0
  %290 = vmatprep.subr.bf16.mxu0 0
  %291 = vmatpush1.bf16.msra.mxu0 0
  %292 = vmatprep.subr.bf16.mxu0 0
  %293 = vmatpush1.bf16.msra.mxu0 0
  %294 = vmatprep.subr.bf16.mxu0 %v275
  %295 = vmatpush1.bf16.msra.mxu0 %v272
  %296 = vmatprep.subr.bf16.mxu0 0
  %297 = vmatpush2.bf16.msra.mxu0 0
  %298 = vmatprep.subr.bf16.mxu0 0
  %299 = vmatpush2.bf16.msra.mxu0 0
  %300 = vmatprep.subr.bf16.mxu0 0
  %301 = vmatpush2.bf16.msra.mxu0 0
  %302 = vmatprep.subr.bf16.mxu0 0
  %303 = vmatpush2.bf16.msra.mxu0 0
  %304 = vmatprep.subr.bf16.mxu0 0
  %305 = vmatpush2.bf16.msra.mxu0 0
  %306 = vmatprep.subr.bf16.mxu0 0
  %307 = vmatpush2.bf16.msra.mxu0 0
  %308 = vmatprep.subr.bf16.mxu0 0
  %309 = vmatpush2.bf16.msra.mxu0 0
  %310 = vmatprep.subr.bf16.mxu0 0
  %311 = vmatpush2.bf16.msra.mxu0 0
  %312 = vmatprep.mubr.bf16.mxu0 0
  %313 = vmatmul.mubr.bf16.gmra.mxu0 %v269
  %v314 = vpop.f32.mrf.mxu0
  %v315 = vadd.f32 0.0, %v314
  %v316 = vpop.f32.mrf.mxu0
  %v317 = vadd.f32 0.0, %v316
  %v318 = vpop.f32.mrf.mxu0
  %v319 = vpop.f32.mrf.mxu0
  %320 = vdwg.mxu0
  %321 = vmatprep.subr.bf16.mxu0 0
  %322 = vmatpush1.bf16.msra.mxu0 0
  %323 = vmatprep.subr.bf16.mxu0 0
  %324 = vmatpush1.bf16.msra.mxu0 0
  %325 = vmatprep.subr.bf16.mxu0 0
  %326 = vmatpush1.bf16.msra.mxu0 0
  %327 = vmatprep.subr.bf16.mxu0 0
  %328 = vmatpush1.bf16.msra.mxu0 0
  %329 = vmatprep.subr.bf16.mxu0 0
  %330 = vmatpush1.bf16.msra.mxu0 0
  %331 = vmatprep.subr.bf16.mxu0 0
  %332 = vmatpush1.bf16.msra.mxu0 0
  %333 = vmatprep.subr.bf16.mxu0 0
  %334 = vmatpush1.bf16.msra.mxu0 0
  %335 = vmatprep.subr.bf16.mxu0 0
  %336 = vmatpush1.bf16.msra.mxu0 %v278
  %337 = vmatprep.subr.bf16.mxu0 0
  %338 = vmatpush2.bf16.msra.mxu0 0
  %339 = vmatprep.subr.bf16.mxu0 0
  %340 = vmatpush2.bf16.msra.mxu0 0
  %341 = vmatprep.subr.bf16.mxu0 0
  %342 = vmatpush2.bf16.msra.mxu0 0
  %343 = vmatprep.subr.bf16.mxu0 0
  %344 = vmatpush2.bf16.msra.mxu0 0
  %345 = vmatprep.subr.bf16.mxu0 0
  %346 = vmatpush2.bf16.msra.mxu0 0
  %347 = vmatprep.subr.bf16.mxu0 0
  %348 = vmatpush2.bf16.msra.mxu0 0
  %349 = vmatprep.subr.bf16.mxu0 0
  %350 = vmatpush2.bf16.msra.mxu0 0
  %351 = vmatprep.subr.bf16.mxu0 0
  %352 = vmatpush2.bf16.msra.mxu0 0
  %353 = vmatprep.mubr.bf16.mxu0 0
  %354 = vmatmul.mubr.bf16.gmra.mxu0 %v269
  %v355 = vpop.f32.mrf.mxu0
  %v356 = vadd.f32 0.0, %v355
  %v357 = vpop.f32.mrf.mxu0
  %v358 = vpop.f32.mrf.mxu0
  %v359 = vpop.f32.mrf.mxu0
  %360 = vdwg.mxu0
  %v361 = vadd.f32 %v193, %v315
  %v362 = vadd.f32 %v195, %v317
  %v363 = vadd.f32 %v234, %v356
  %v364 = vld [vmem:[%s0] sm:$0x3f]
  %s365 = scalar_lea.vmem %s1, 12
  %v366 = vld [vmem:[%s365] sm:$0xf]
  %v368 = vcombine.high %v364, %v364
  %v370 = vunpack.c.l.s4 1983009808
  %v371 = vunpack.c.0.s8 %v370
  %v372 = vlaneseq
  %v373 = vshrl.u32 %v372, 7
  %v374 = vsub.s32 %v371, %v373
  %v375 = vrot.slane %v364, %v374
  %v377 = vunpack.c.l.s4 1983009808
  %v378 = vunpack.c.0.s8 %v377
  %v379 = vlaneseq
  %v380 = vshrl.u32 %v379, 7
  %v381 = vsub.s32 %v378, %v380
  %v382 = vrot.slane %v368, %v381
  %v383 = vcombine.high %v375, %v375
  %384 = vrot.lane.b32.xlu0 %v375, 110
  %v385 = vpop.permute.xlu0 %384
  %386 = vrot.lane.b32.xlu0 %v383, 110
  %v387 = vpop.permute.xlu0 %386
  %388 = vrot.lane.b32.xlu0 %v382, 110
  %v389 = vpop.permute.xlu0 %388
  %vm390 = vcmask 900096
  %v391 = vsel %vm390, %v385, %v387
  %v392 = vsel %vm390, %v387, %v389
  %v394 = vsel %vm51, %v366, 0
  %v397 = vsel %vm55, %v391, 0
  %v400 = vsel %vm55, %v392, 0
  %v403 = vsel %vm55, %v389, 0
  %405 = vmatprep.subr.bf16.mxu0 0
  %406 = vmatpush1.bf16.msra.mxu0 0
  %407 = vmatprep.subr.bf16.mxu0 0
  %408 = vmatpush1.bf16.msra.mxu0 0
  %409 = vmatprep.subr.bf16.mxu0 0
  %410 = vmatpush1.bf16.msra.mxu0 0
  %411 = vmatprep.subr.bf16.mxu0 0
  %412 = vmatpush1.bf16.msra.mxu0 0
  %413 = vmatprep.subr.bf16.mxu0 0
  %414 = vmatpush1.bf16.msra.mxu0 0
  %415 = vmatprep.subr.bf16.mxu0 0
  %416 = vmatpush1.bf16.msra.mxu0 0
  %417 = vmatprep.subr.bf16.mxu0 0
  %418 = vmatpush1.bf16.msra.mxu0 0
  %419 = vmatprep.subr.bf16.mxu0 %v400
  %420 = vmatpush1.bf16.msra.mxu0 %v397
  %421 = vmatprep.subr.bf16.mxu0 0
  %422 = vmatpush2.bf16.msra.mxu0 0
  %423 = vmatprep.subr.bf16.mxu0 0
  %424 = vmatpush2.bf16.msra.mxu0 0
  %425 = vmatprep.subr.bf16.mxu0 0
  %426 = vmatpush2.bf16.msra.mxu0 0
  %427 = vmatprep.subr.bf16.mxu0 0
  %428 = vmatpush2.bf16.msra.mxu0 0
  %429 = vmatprep.subr.bf16.mxu0 0
  %430 = vmatpush2.bf16.msra.mxu0 0
  %431 = vmatprep.subr.bf16.mxu0 0
  %432 = vmatpush2.bf16.msra.mxu0 0
  %433 = vmatprep.subr.bf16.mxu0 0
  %434 = vmatpush2.bf16.msra.mxu0 0
  %435 = vmatprep.subr.bf16.mxu0 0
  %436 = vmatpush2.bf16.msra.mxu0 0
  %437 = vmatprep.mubr.bf16.mxu0 0
  %438 = vmatmul.mubr.bf16.gmra.mxu0 %v394
  %v439 = vpop.f32.mrf.mxu0
  %v440 = vadd.f32 0.0, %v439
  %v441 = vpop.f32.mrf.mxu0
  %v442 = vadd.f32 0.0, %v441
  %v443 = vpop.f32.mrf.mxu0
  %v444 = vpop.f32.mrf.mxu0
  %445 = vdwg.mxu0
  %446 = vmatprep.subr.bf16.mxu0 0
  %447 = vmatpush1.bf16.msra.mxu0 0
  %448 = vmatprep.subr.bf16.mxu0 0
  %449 = vmatpush1.bf16.msra.mxu0 0
  %450 = vmatprep.subr.bf16.mxu0 0
  %451 = vmatpush1.bf16.msra.mxu0 0
  %452 = vmatprep.subr.bf16.mxu0 0
  %453 = vmatpush1.bf16.msra.mxu0 0
  %454 = vmatprep.subr.bf16.mxu0 0
  %455 = vmatpush1.bf16.msra.mxu0 0
  %456 = vmatprep.subr.bf16.mxu0 0
  %457 = vmatpush1.bf16.msra.mxu0 0
  %458 = vmatprep.subr.bf16.mxu0 0
  %459 = vmatpush1.bf16.msra.mxu0 0
  %460 = vmatprep.subr.bf16.mxu0 0
  %461 = vmatpush1.bf16.msra.mxu0 %v403
  %462 = vmatprep.subr.bf16.mxu0 0
  %463 = vmatpush2.bf16.msra.mxu0 0
  %464 = vmatprep.subr.bf16.mxu0 0
  %465 = vmatpush2.bf16.msra.mxu0 0
  %466 = vmatprep.subr.bf16.mxu0 0
  %467 = vmatpush2.bf16.msra.mxu0 0
  %468 = vmatprep.subr.bf16.mxu0 0
  %469 = vmatpush2.bf16.msra.mxu0 0
  %470 = vmatprep.subr.bf16.mxu0 0
  %471 = vmatpush2.bf16.msra.mxu0 0
  %472 = vmatprep.subr.bf16.mxu0 0
  %473 = vmatpush2.bf16.msra.mxu0 0
  %474 = vmatprep.subr.bf16.mxu0 0
  %475 = vmatpush2.bf16.msra.mxu0 0
  %476 = vmatprep.subr.bf16.mxu0 0
  %477 = vmatpush2.bf16.msra.mxu0 0
  %478 = vmatprep.mubr.bf16.mxu0 0
  %479 = vmatmul.mubr.bf16.gmra.mxu0 %v394
  %v480 = vpop.f32.mrf.mxu0
  %v481 = vadd.f32 0.0, %v480
  %v482 = vpop.f32.mrf.mxu0
  %v483 = vpop.f32.mrf.mxu0
  %v484 = vpop.f32.mrf.mxu0
  %485 = vdwg.mxu0
  %v486 = vadd.f32 %v361, %v440
  %v487 = vadd.f32 %v362, %v442
  %v488 = vadd.f32 %v363, %v481
  %v489 = vld [vmem:[%s0] sm:$0x3f]
  %s490 = scalar_lea.vmem %s1, 16
  %v491 = vld [vmem:[%s490] sm:$0xf]
  %v493 = vcombine.high %v489, %v489
  %v495 = vunpack.c.l.s4 1983009808
  %v496 = vunpack.c.0.s8 %v495
  %v497 = vlaneseq
  %v498 = vshrl.u32 %v497, 7
  %v499 = vsub.s32 %v496, %v498
  %v500 = vrot.slane %v489, %v499
  %v502 = vunpack.c.l.s4 1983009808
  %v503 = vunpack.c.0.s8 %v502
  %v504 = vlaneseq
  %v505 = vshrl.u32 %v504, 7
  %v506 = vsub.s32 %v503, %v505
  %v507 = vrot.slane %v493, %v506
  %v508 = vcombine.high %v500, %v500
  %509 = vrot.lane.b32.xlu0 %v500, 109
  %v510 = vpop.permute.xlu0 %509
  %511 = vrot.lane.b32.xlu0 %v508, 109
  %v512 = vpop.permute.xlu0 %511
  %513 = vrot.lane.b32.xlu0 %v507, 109
  %v514 = vpop.permute.xlu0 %513
  %vm515 = vcmask 891904
  %v516 = vsel %vm515, %v510, %v512
  %v517 = vsel %vm515, %v512, %v514
  %v519 = vsel %vm51, %v491, 0
  %v522 = vsel %vm55, %v516, 0
  %v525 = vsel %vm55, %v517, 0
  %v528 = vsel %vm55, %v514, 0
  %530 = vmatprep.subr.bf16.mxu0 0
  %531 = vmatpush1.bf16.msra.mxu0 0
  %532 = vmatprep.subr.bf16.mxu0 0
  %533 = vmatpush1.bf16.msra.mxu0 0
  %534 = vmatprep.subr.bf16.mxu0 0
  %535 = vmatpush1.bf16.msra.mxu0 0
  %536 = vmatprep.subr.bf16.mxu0 0
  %537 = vmatpush1.bf16.msra.mxu0 0
  %538 = vmatprep.subr.bf16.mxu0 0
  %539 = vmatpush1.bf16.msra.mxu0 0
  %540 = vmatprep.subr.bf16.mxu0 0
  %541 = vmatpush1.bf16.msra.mxu0 0
  %542 = vmatprep.subr.bf16.mxu0 0
  %543 = vmatpush1.bf16.msra.mxu0 0
  %544 = vmatprep.subr.bf16.mxu0 %v525
  %545 = vmatpush1.bf16.msra.mxu0 %v522
  %546 = vmatprep.subr.bf16.mxu0 0
  %547 = vmatpush2.bf16.msra.mxu0 0
  %548 = vmatprep.subr.bf16.mxu0 0
  %549 = vmatpush2.bf16.msra.mxu0 0
  %550 = vmatprep.subr.bf16.mxu0 0
  %551 = vmatpush2.bf16.msra.mxu0 0
  %552 = vmatprep.subr.bf16.mxu0 0
  %553 = vmatpush2.bf16.msra.mxu0 0
  %554 = vmatprep.subr.bf16.mxu0 0
  %555 = vmatpush2.bf16.msra.mxu0 0
  %556 = vmatprep.subr.bf16.mxu0 0
  %557 = vmatpush2.bf16.msra.mxu0 0
  %558 = vmatprep.subr.bf16.mxu0 0
  %559 = vmatpush2.bf16.msra.mxu0 0
  %560 = vmatprep.subr.bf16.mxu0 0
  %561 = vmatpush2.bf16.msra.mxu0 0
  %562 = vmatprep.mubr.bf16.mxu0 0
  %563 = vmatmul.mubr.bf16.gmra.mxu0 %v519
  %v564 = vpop.f32.mrf.mxu0
  %v565 = vadd.f32 0.0, %v564
  %v566 = vpop.f32.mrf.mxu0
  %v567 = vadd.f32 0.0, %v566
  %v568 = vpop.f32.mrf.mxu0
  %v569 = vpop.f32.mrf.mxu0
  %570 = vdwg.mxu0
  %571 = vmatprep.subr.bf16.mxu0 0
  %572 = vmatpush1.bf16.msra.mxu0 0
  %573 = vmatprep.subr.bf16.mxu0 0
  %574 = vmatpush1.bf16.msra.mxu0 0
  %575 = vmatprep.subr.bf16.mxu0 0
  %576 = vmatpush1.bf16.msra.mxu0 0
  %577 = vmatprep.subr.bf16.mxu0 0
  %578 = vmatpush1.bf16.msra.mxu0 0
  %579 = vmatprep.subr.bf16.mxu0 0
  %580 = vmatpush1.bf16.msra.mxu0 0
  %581 = vmatprep.subr.bf16.mxu0 0
  %582 = vmatpush1.bf16.msra.mxu0 0
  %583 = vmatprep.subr.bf16.mxu0 0
  %584 = vmatpush1.bf16.msra.mxu0 0
  %585 = vmatprep.subr.bf16.mxu0 0
  %586 = vmatpush1.bf16.msra.mxu0 %v528
  %587 = vmatprep.subr.bf16.mxu0 0
  %588 = vmatpush2.bf16.msra.mxu0 0
  %589 = vmatprep.subr.bf16.mxu0 0
  %590 = vmatpush2.bf16.msra.mxu0 0
  %591 = vmatprep.subr.bf16.mxu0 0
  %592 = vmatpush2.bf16.msra.mxu0 0
  %593 = vmatprep.subr.bf16.mxu0 0
  %594 = vmatpush2.bf16.msra.mxu0 0
  %595 = vmatprep.subr.bf16.mxu0 0
  %596 = vmatpush2.bf16.msra.mxu0 0
  %597 = vmatprep.subr.bf16.mxu0 0
  %598 = vmatpush2.bf16.msra.mxu0 0
  %599 = vmatprep.subr.bf16.mxu0 0
  %600 = vmatpush2.bf16.msra.mxu0 0
  %601 = vmatprep.subr.bf16.mxu0 0
  %602 = vmatpush2.bf16.msra.mxu0 0
  %603 = vmatprep.mubr.bf16.mxu0 0
  %604 = vmatmul.mubr.bf16.gmra.mxu0 %v519
  %v605 = vpop.f32.mrf.mxu0
  %v606 = vadd.f32 0.0, %v605
  %v607 = vpop.f32.mrf.mxu0
  %v608 = vpop.f32.mrf.mxu0
  %v609 = vpop.f32.mrf.mxu0
  %610 = vdwg.mxu0
  %v611 = vadd.f32 %v486, %v565
  %v612 = vadd.f32 %v487, %v567
  %v613 = vadd.f32 %v488, %v606
  %v614 = vld [vmem:[%s0] sm:$0x3f]
  %s615 = scalar_lea.vmem %s1, 20
  %v616 = vld [vmem:[%s615] sm:$0xf]
  %v618 = vcombine.high %v614, %v614
  %v620 = vunpack.c.l.s4 1983009808
  %v621 = vunpack.c.0.s8 %v620
  %v622 = vlaneseq
  %v623 = vshrl.u32 %v622, 7
  %v624 = vsub.s32 %v621, %v623
  %v625 = vrot.slane %v614, %v624
  %v627 = vunpack.c.l.s4 1983009808
  %v628 = vunpack.c.0.s8 %v627
  %v629 = vlaneseq
  %v630 = vshrl.u32 %v629, 7
  %v631 = vsub.s32 %v628, %v630
  %v632 = vrot.slane %v618, %v631
  %v633 = vcombine.high %v625, %v625
  %634 = vrot.lane.b32.xlu0 %v625, 108
  %v635 = vpop.permute.xlu0 %634
  %636 = vrot.lane.b32.xlu0 %v633, 108
  %v637 = vpop.permute.xlu0 %636
  %638 = vrot.lane.b32.xlu0 %v632, 108
  %v639 = vpop.permute.xlu0 %638
  %vm640 = vcmask 883712
  %v641 = vsel %vm640, %v635, %v637
  %v642 = vsel %vm640, %v637, %v639
  %v644 = vsel %vm51, %v616, 0
  %v647 = vsel %vm55, %v641, 0
  %v650 = vsel %vm55, %v642, 0
  %v653 = vsel %vm55, %v639, 0
  %655 = vmatprep.subr.bf16.mxu0 0
  %656 = vmatpush1.bf16.msra.mxu0 0
  %657 = vmatprep.subr.bf16.mxu0 0
  %658 = vmatpush1.bf16.msra.mxu0 0
  %659 = vmatprep.subr.bf16.mxu0 0
  %660 = vmatpush1.bf16.msra.mxu0 0
  %661 = vmatprep.subr.bf16.mxu0 0
  %662 = vmatpush1.bf16.msra.mxu0 0
  %663 = vmatprep.subr.bf16.mxu0 0
  %664 = vmatpush1.bf16.msra.mxu0 0
  %665 = vmatprep.subr.bf16.mxu0 0
  %666 = vmatpush1.bf16.msra.mxu0 0
  %667 = vmatprep.subr.bf16.mxu0 0
  %668 = vmatpush1.bf16.msra.mxu0 0
  %669 = vmatprep.subr.bf16.mxu0 %v650
  %670 = vmatpush1.bf16.msra.mxu0 %v647
  %671 = vmatprep.subr.bf16.mxu0 0
  %672 = vmatpush2.bf16.msra.mxu0 0
  %673 = vmatprep.subr.bf16.mxu0 0
  %674 = vmatpush2.bf16.msra.mxu0 0
  %675 = vmatprep.subr.bf16.mxu0 0
  %676 = vmatpush2.bf16.msra.mxu0 0
  %677 = vmatprep.subr.bf16.mxu0 0
  %678 = vmatpush2.bf16.msra.mxu0 0
  %679 = vmatprep.subr.bf16.mxu0 0
  %680 = vmatpush2.bf16.msra.mxu0 0
  %681 = vmatprep.subr.bf16.mxu0 0
  %682 = vmatpush2.bf16.msra.mxu0 0
  %683 = vmatprep.subr.bf16.mxu0 0
  %684 = vmatpush2.bf16.msra.mxu0 0
  %685 = vmatprep.subr.bf16.mxu0 0
  %686 = vmatpush2.bf16.msra.mxu0 0
  %687 = vmatprep.mubr.bf16.mxu0 0
  %688 = vmatmul.mubr.bf16.gmra.mxu0 %v644
  %v689 = vpop.f32.mrf.mxu0
  %v690 = vadd.f32 0.0, %v689
  %v691 = vpop.f32.mrf.mxu0
  %v692 = vadd.f32 0.0, %v691
  %v693 = vpop.f32.mrf.mxu0
  %v694 = vpop.f32.mrf.mxu0
  %695 = vdwg.mxu0
  %696 = vmatprep.subr.bf16.mxu0 0
  %697 = vmatpush1.bf16.msra.mxu0 0
  %698 = vmatprep.subr.bf16.mxu0 0
  %699 = vmatpush1.bf16.msra.mxu0 0
  %700 = vmatprep.subr.bf16.mxu0 0
  %701 = vmatpush1.bf16.msra.mxu0 0
  %702 = vmatprep.subr.bf16.mxu0 0
  %703 = vmatpush1.bf16.msra.mxu0 0
  %704 = vmatprep.subr.bf16.mxu0 0
  %705 = vmatpush1.bf16.msra.mxu0 0
  %706 = vmatprep.subr.bf16.mxu0 0
  %707 = vmatpush1.bf16.msra.mxu0 0
  %708 = vmatprep.subr.bf16.mxu0 0
  %709 = vmatpush1.bf16.msra.mxu0 0
  %710 = vmatprep.subr.bf16.mxu0 0
  %711 = vmatpush1.bf16.msra.mxu0 %v653
  %712 = vmatprep.subr.bf16.mxu0 0
  %713 = vmatpush2.bf16.msra.mxu0 0
  %714 = vmatprep.subr.bf16.mxu0 0
  %715 = vmatpush2.bf16.msra.mxu0 0
  %716 = vmatprep.subr.bf16.mxu0 0
  %717 = vmatpush2.bf16.msra.mxu0 0
  %718 = vmatprep.subr.bf16.mxu0 0
  %719 = vmatpush2.bf16.msra.mxu0 0
  %720 = vmatprep.subr.bf16.mxu0 0
  %721 = vmatpush2.bf16.msra.mxu0 0
  %722 = vmatprep.subr.bf16.mxu0 0
  %723 = vmatpush2.bf16.msra.mxu0 0
  %724 = vmatprep.subr.bf16.mxu0 0
  %725 = vmatpush2.bf16.msra.mxu0 0
  %726 = vmatprep.subr.bf16.mxu0 0
  %727 = vmatpush2.bf16.msra.mxu0 0
  %728 = vmatprep.mubr.bf16.mxu0 0
  %729 = vmatmul.mubr.bf16.gmra.mxu0 %v644
  %v730 = vpop.f32.mrf.mxu0
  %v731 = vadd.f32 0.0, %v730
  %v732 = vpop.f32.mrf.mxu0
  %v733 = vpop.f32.mrf.mxu0
  %v734 = vpop.f32.mrf.mxu0
  %735 = vdwg.mxu0
  %v736 = vadd.f32 %v611, %v690
  %v737 = vadd.f32 %v612, %v692
  %v738 = vadd.f32 %v613, %v731
  %v739 = vld [vmem:[%s0] sm:$0x3f]
  %s740 = scalar_lea.vmem %s1, 24
  %v741 = vld [vmem:[%s740] sm:$0xf]
  %v743 = vcombine.high %v739, %v739
  %v745 = vunpack.c.l.s4 1983009808
  %v746 = vunpack.c.0.s8 %v745
  %v747 = vlaneseq
  %v748 = vshrl.u32 %v747, 7
  %v749 = vsub.s32 %v746, %v748
  %v750 = vrot.slane %v739, %v749
  %v752 = vunpack.c.l.s4 1983009808
  %v753 = vunpack.c.0.s8 %v752
  %v754 = vlaneseq
  %v755 = vshrl.u32 %v754, 7
  %v756 = vsub.s32 %v753, %v755
  %v757 = vrot.slane %v743, %v756
  %v758 = vcombine.high %v750, %v750
  %759 = vrot.lane.b32.xlu0 %v750, 92
  %v760 = vpop.permute.xlu0 %759
  %761 = vrot.lane.b32.xlu0 %v758, 92
  %v762 = vpop.permute.xlu0 %761
  %763 = vrot.lane.b32.xlu0 %v757, 92
  %v764 = vpop.permute.xlu0 %763
  %vm765 = vcmask 752640
  %v766 = vsel %vm765, %v760, %v762
  %v767 = vsel %vm765, %v762, %v764
  %v769 = vsel %vm51, %v741, 0
  %v772 = vsel %vm55, %v766, 0
  %v775 = vsel %vm55, %v767, 0
  %v778 = vsel %vm55, %v764, 0
  %780 = vmatprep.subr.bf16.mxu0 0
  %781 = vmatpush1.bf16.msra.mxu0 0
  %782 = vmatprep.subr.bf16.mxu0 0
  %783 = vmatpush1.bf16.msra.mxu0 0
  %784 = vmatprep.subr.bf16.mxu0 0
  %785 = vmatpush1.bf16.msra.mxu0 0
  %786 = vmatprep.subr.bf16.mxu0 0
  %787 = vmatpush1.bf16.msra.mxu0 0
  %788 = vmatprep.subr.bf16.mxu0 0
  %789 = vmatpush1.bf16.msra.mxu0 0
  %790 = vmatprep.subr.bf16.mxu0 0
  %791 = vmatpush1.bf16.msra.mxu0 0
  %792 = vmatprep.subr.bf16.mxu0 0
  %793 = vmatpush1.bf16.msra.mxu0 0
  %794 = vmatprep.subr.bf16.mxu0 %v775
  %795 = vmatpush1.bf16.msra.mxu0 %v772
  %796 = vmatprep.subr.bf16.mxu0 0
  %797 = vmatpush2.bf16.msra.mxu0 0
  %798 = vmatprep.subr.bf16.mxu0 0
  %799 = vmatpush2.bf16.msra.mxu0 0
  %800 = vmatprep.subr.bf16.mxu0 0
  %801 = vmatpush2.bf16.msra.mxu0 0
  %802 = vmatprep.subr.bf16.mxu0 0
  %803 = vmatpush2.bf16.msra.mxu0 0
  %804 = vmatprep.subr.bf16.mxu0 0
  %805 = vmatpush2.bf16.msra.mxu0 0
  %806 = vmatprep.subr.bf16.mxu0 0
  %807 = vmatpush2.bf16.msra.mxu0 0
  %808 = vmatprep.subr.bf16.mxu0 0
  %809 = vmatpush2.bf16.msra.mxu0 0
  %810 = vmatprep.subr.bf16.mxu0 0
  %811 = vmatpush2.bf16.msra.mxu0 0
  %812 = vmatprep.mubr.bf16.mxu0 0
  %813 = vmatmul.mubr.bf16.gmra.mxu0 %v769
  %v814 = vpop.f32.mrf.mxu0
  %v815 = vadd.f32 0.0, %v814
  %v816 = vpop.f32.mrf.mxu0
  %v817 = vadd.f32 0.0, %v816
  %v818 = vpop.f32.mrf.mxu0
  %v819 = vpop.f32.mrf.mxu0
  %820 = vdwg.mxu0
  %821 = vmatprep.subr.bf16.mxu0 0
  %822 = vmatpush1.bf16.msra.mxu0 0
  %823 = vmatprep.subr.bf16.mxu0 0
  %824 = vmatpush1.bf16.msra.mxu0 0
  %825 = vmatprep.subr.bf16.mxu0 0
  %826 = vmatpush1.bf16.msra.mxu0 0
  %827 = vmatprep.subr.bf16.mxu0 0
  %828 = vmatpush1.bf16.msra.mxu0 0
  %829 = vmatprep.subr.bf16.mxu0 0
  %830 = vmatpush1.bf16.msra.mxu0 0
  %831 = vmatprep.subr.bf16.mxu0 0
  %832 = vmatpush1.bf16.msra.mxu0 0
  %833 = vmatprep.subr.bf16.mxu0 0
  %834 = vmatpush1.bf16.msra.mxu0 0
  %835 = vmatprep.subr.bf16.mxu0 0
  %836 = vmatpush1.bf16.msra.mxu0 %v778
  %837 = vmatprep.subr.bf16.mxu0 0
  %838 = vmatpush2.bf16.msra.mxu0 0
  %839 = vmatprep.subr.bf16.mxu0 0
  %840 = vmatpush2.bf16.msra.mxu0 0
  %841 = vmatprep.subr.bf16.mxu0 0
  %842 = vmatpush2.bf16.msra.mxu0 0
  %843 = vmatprep.subr.bf16.mxu0 0
  %844 = vmatpush2.bf16.msra.mxu0 0
  %845 = vmatprep.subr.bf16.mxu0 0
  %846 = vmatpush2.bf16.msra.mxu0 0
  %847 = vmatprep.subr.bf16.mxu0 0
  %848 = vmatpush2.bf16.msra.mxu0 0
  %849 = vmatprep.subr.bf16.mxu0 0
  %850 = vmatpush2.bf16.msra.mxu0 0
  %851 = vmatprep.subr.bf16.mxu0 0
  %852 = vmatpush2.bf16.msra.mxu0 0
  %853 = vmatprep.mubr.bf16.mxu0 0
  %854 = vmatmul.mubr.bf16.gmra.mxu0 %v769
  %v855 = vpop.f32.mrf.mxu0
  %v856 = vadd.f32 0.0, %v855
  %v857 = vpop.f32.mrf.mxu0
  %v858 = vpop.f32.mrf.mxu0
  %v859 = vpop.f32.mrf.mxu0
  %860 = vdwg.mxu0
  %v861 = vadd.f32 %v736, %v815
  %v862 = vadd.f32 %v737, %v817
  %v863 = vadd.f32 %v738, %v856
  %v864 = vld [vmem:[%s0] sm:$0x3f]
  %s865 = scalar_lea.vmem %s1, 28
  %v866 = vld [vmem:[%s865] sm:$0xf]
  %v868 = vcombine.high %v864, %v864
  %v870 = vunpack.c.l.s4 1983009808
  %v871 = vunpack.c.0.s8 %v870
  %v872 = vlaneseq
  %v873 = vshrl.u32 %v872, 7
  %v874 = vsub.s32 %v871, %v873
  %v875 = vrot.slane %v864, %v874
  %v877 = vunpack.c.l.s4 1983009808
  %v878 = vunpack.c.0.s8 %v877
  %v879 = vlaneseq
  %v880 = vshrl.u32 %v879, 7
  %v881 = vsub.s32 %v878, %v880
  %v882 = vrot.slane %v868, %v881
  %v883 = vcombine.high %v875, %v875
  %884 = vrot.lane.b32.xlu0 %v875, 91
  %v885 = vpop.permute.xlu0 %884
  %886 = vrot.lane.b32.xlu0 %v883, 91
  %v887 = vpop.permute.xlu0 %886
  %888 = vrot.lane.b32.xlu0 %v882, 91
  %v889 = vpop.permute.xlu0 %888
  %vm890 = vcmask 744448
  %v891 = vsel %vm890, %v885, %v887
  %v892 = vsel %vm890, %v887, %v889
  %v894 = vsel %vm51, %v866, 0
  %v897 = vsel %vm55, %v891, 0
  %v900 = vsel %vm55, %v892, 0
  %v903 = vsel %vm55, %v889, 0
  %905 = vmatprep.subr.bf16.mxu0 0
  %906 = vmatpush1.bf16.msra.mxu0 0
  %907 = vmatprep.subr.bf16.mxu0 0
  %908 = vmatpush1.bf16.msra.mxu0 0
  %909 = vmatprep.subr.bf16.mxu0 0
  %910 = vmatpush1.bf16.msra.mxu0 0
  %911 = vmatprep.subr.bf16.mxu0 0
  %912 = vmatpush1.bf16.msra.mxu0 0
  %913 = vmatprep.subr.bf16.mxu0 0
  %914 = vmatpush1.bf16.msra.mxu0 0
  %915 = vmatprep.subr.bf16.mxu0 0
  %916 = vmatpush1.bf16.msra.mxu0 0
  %917 = vmatprep.subr.bf16.mxu0 0
  %918 = vmatpush1.bf16.msra.mxu0 0
  %919 = vmatprep.subr.bf16.mxu0 %v900
  %920 = vmatpush1.bf16.msra.mxu0 %v897
  %921 = vmatprep.subr.bf16.mxu0 0
  %922 = vmatpush2.bf16.msra.mxu0 0
  %923 = vmatprep.subr.bf16.mxu0 0
  %924 = vmatpush2.bf16.msra.mxu0 0
  %925 = vmatprep.subr.bf16.mxu0 0
  %926 = vmatpush2.bf16.msra.mxu0 0
  %927 = vmatprep.subr.bf16.mxu0 0
  %928 = vmatpush2.bf16.msra.mxu0 0
  %929 = vmatprep.subr.bf16.mxu0 0
  %930 = vmatpush2.bf16.msra.mxu0 0
  %931 = vmatprep.subr.bf16.mxu0 0
  %932 = vmatpush2.bf16.msra.mxu0 0
  %933 = vmatprep.subr.bf16.mxu0 0
  %934 = vmatpush2.bf16.msra.mxu0 0
  %935 = vmatprep.subr.bf16.mxu0 0
  %936 = vmatpush2.bf16.msra.mxu0 0
  %937 = vmatprep.mubr.bf16.mxu0 0
  %938 = vmatmul.mubr.bf16.gmra.mxu0 %v894
  %v939 = vpop.f32.mrf.mxu0
  %v940 = vadd.f32 0.0, %v939
  %v941 = vpop.f32.mrf.mxu0
  %v942 = vadd.f32 0.0, %v941
  %v943 = vpop.f32.mrf.mxu0
  %v944 = vpop.f32.mrf.mxu0
  %945 = vdwg.mxu0
  %946 = vmatprep.subr.bf16.mxu0 0
  %947 = vmatpush1.bf16.msra.mxu0 0
  %948 = vmatprep.subr.bf16.mxu0 0
  %949 = vmatpush1.bf16.msra.mxu0 0
  %950 = vmatprep.subr.bf16.mxu0 0
  %951 = vmatpush1.bf16.msra.mxu0 0
  %952 = vmatprep.subr.bf16.mxu0 0
  %953 = vmatpush1.bf16.msra.mxu0 0
  %954 = vmatprep.subr.bf16.mxu0 0
  %955 = vmatpush1.bf16.msra.mxu0 0
  %956 = vmatprep.subr.bf16.mxu0 0
  %957 = vmatpush1.bf16.msra.mxu0 0
  %958 = vmatprep.subr.bf16.mxu0 0
  %959 = vmatpush1.bf16.msra.mxu0 0
  %960 = vmatprep.subr.bf16.mxu0 0
  %961 = vmatpush1.bf16.msra.mxu0 %v903
  %962 = vmatprep.subr.bf16.mxu0 0
  %963 = vmatpush2.bf16.msra.mxu0 0
  %964 = vmatprep.subr.bf16.mxu0 0
  %965 = vmatpush2.bf16.msra.mxu0 0
  %966 = vmatprep.subr.bf16.mxu0 0
  %967 = vmatpush2.bf16.msra.mxu0 0
  %968 = vmatprep.subr.bf16.mxu0 0
  %969 = vmatpush2.bf16.msra.mxu0 0
  %970 = vmatprep.subr.bf16.mxu0 0
  %971 = vmatpush2.bf16.msra.mxu0 0
  %972 = vmatprep.subr.bf16.mxu0 0
  %973 = vmatpush2.bf16.msra.mxu0 0
  %974 = vmatprep.subr.bf16.mxu0 0
  %975 = vmatpush2.bf16.msra.mxu0 0
  %976 = vmatprep.subr.bf16.mxu0 0
  %977 = vmatpush2.bf16.msra.mxu0 0
  %978 = vmatprep.mubr.bf16.mxu0 0
  %979 = vmatmul.mubr.bf16.gmra.mxu0 %v894
  %v980 = vpop.f32.mrf.mxu0
  %v981 = vadd.f32 0.0, %v980
  %v982 = vpop.f32.mrf.mxu0
  %v983 = vpop.f32.mrf.mxu0
  %v984 = vpop.f32.mrf.mxu0
  %985 = vdwg.mxu0
  %v986 = vadd.f32 %v861, %v940
  %v987 = vadd.f32 %v862, %v942
  %v988 = vadd.f32 %v863, %v981
  %v989 = vld [vmem:[%s0] sm:$0x3f]
  %s990 = scalar_lea.vmem %s1, 32
  %v991 = vld [vmem:[%s990] sm:$0xf]
  %v993 = vcombine.high %v989, %v989
  %v995 = vunpack.c.l.s4 1983009808
  %v996 = vunpack.c.0.s8 %v995
  %v997 = vlaneseq
  %v998 = vshrl.u32 %v997, 7
  %v999 = vsub.s32 %v996, %v998
  %v1000 = vrot.slane %v989, %v999
  %v1002 = vunpack.c.l.s4 1983009808
  %v1003 = vunpack.c.0.s8 %v1002
  %v1004 = vlaneseq
  %v1005 = vshrl.u32 %v1004, 7
  %v1006 = vsub.s32 %v1003, %v1005
  %v1007 = vrot.slane %v993, %v1006
  %v1008 = vcombine.high %v1000, %v1000
  %1009 = vrot.lane.b32.xlu0 %v1000, 90
  %v1010 = vpop.permute.xlu0 %1009
  %1011 = vrot.lane.b32.xlu0 %v1008, 90
  %v1012 = vpop.permute.xlu0 %1011
  %1013 = vrot.lane.b32.xlu0 %v1007, 90
  %v1014 = vpop.permute.xlu0 %1013
  %vm1015 = vcmask 736256
  %v1016 = vsel %vm1015, %v1010, %v1012
  %v1017 = vsel %vm1015, %v1012, %v1014
  %v1019 = vsel %vm51, %v991, 0
  %v1022 = vsel %vm55, %v1016, 0
  %v1025 = vsel %vm55, %v1017, 0
  %v1028 = vsel %vm55, %v1014, 0
  %1030 = vmatprep.subr.bf16.mxu0 0
  %1031 = vmatpush1.bf16.msra.mxu0 0
  %1032 = vmatprep.subr.bf16.mxu0 0
  %1033 = vmatpush1.bf16.msra.mxu0 0
  %1034 = vmatprep.subr.bf16.mxu0 0
  %1035 = vmatpush1.bf16.msra.mxu0 0
  %1036 = vmatprep.subr.bf16.mxu0 0
  %1037 = vmatpush1.bf16.msra.mxu0 0
  %1038 = vmatprep.subr.bf16.mxu0 0
  %1039 = vmatpush1.bf16.msra.mxu0 0
  %1040 = vmatprep.subr.bf16.mxu0 0
  %1041 = vmatpush1.bf16.msra.mxu0 0
  %1042 = vmatprep.subr.bf16.mxu0 0
  %1043 = vmatpush1.bf16.msra.mxu0 0
  %1044 = vmatprep.subr.bf16.mxu0 %v1025
  %1045 = vmatpush1.bf16.msra.mxu0 %v1022
  %1046 = vmatprep.subr.bf16.mxu0 0
  %1047 = vmatpush2.bf16.msra.mxu0 0
  %1048 = vmatprep.subr.bf16.mxu0 0
  %1049 = vmatpush2.bf16.msra.mxu0 0
  %1050 = vmatprep.subr.bf16.mxu0 0
  %1051 = vmatpush2.bf16.msra.mxu0 0
  %1052 = vmatprep.subr.bf16.mxu0 0
  %1053 = vmatpush2.bf16.msra.mxu0 0
  %1054 = vmatprep.subr.bf16.mxu0 0
  %1055 = vmatpush2.bf16.msra.mxu0 0
  %1056 = vmatprep.subr.bf16.mxu0 0
  %1057 = vmatpush2.bf16.msra.mxu0 0
  %1058 = vmatprep.subr.bf16.mxu0 0
  %1059 = vmatpush2.bf16.msra.mxu0 0
  %1060 = vmatprep.subr.bf16.mxu0 0
  %1061 = vmatpush2.bf16.msra.mxu0 0
  %1062 = vmatprep.mubr.bf16.mxu0 0
  %1063 = vmatmul.mubr.bf16.gmra.mxu0 %v1019
  %v1064 = vpop.f32.mrf.mxu0
  %v1065 = vadd.f32 0.0, %v1064
  %v1066 = vpop.f32.mrf.mxu0
  %v1067 = vadd.f32 0.0, %v1066
  %v1068 = vpop.f32.mrf.mxu0
  %v1069 = vpop.f32.mrf.mxu0
  %1070 = vdwg.mxu0
  %1071 = vmatprep.subr.bf16.mxu0 0
  %1072 = vmatpush1.bf16.msra.mxu0 0
  %1073 = vmatprep.subr.bf16.mxu0 0
  %1074 = vmatpush1.bf16.msra.mxu0 0
  %1075 = vmatprep.subr.bf16.mxu0 0
  %1076 = vmatpush1.bf16.msra.mxu0 0
  %1077 = vmatprep.subr.bf16.mxu0 0
  %1078 = vmatpush1.bf16.msra.mxu0 0
  %1079 = vmatprep.subr.bf16.mxu0 0
  %1080 = vmatpush1.bf16.msra.mxu0 0
  %1081 = vmatprep.subr.bf16.mxu0 0
  %1082 = vmatpush1.bf16.msra.mxu0 0
  %1083 = vmatprep.subr.bf16.mxu0 0
  %1084 = vmatpush1.bf16.msra.mxu0 0
  %1085 = vmatprep.subr.bf16.mxu0 0
  %1086 = vmatpush1.bf16.msra.mxu0 %v1028
  %1087 = vmatprep.subr.bf16.mxu0 0
  %1088 = vmatpush2.bf16.msra.mxu0 0
  %1089 = vmatprep.subr.bf16.mxu0 0
  %1090 = vmatpush2.bf16.msra.mxu0 0
  %1091 = vmatprep.subr.bf16.mxu0 0
  %1092 = vmatpush2.bf16.msra.mxu0 0
  %1093 = vmatprep.subr.bf16.mxu0 0
  %1094 = vmatpush2.bf16.msra.mxu0 0
  %1095 = vmatprep.subr.bf16.mxu0 0
  %1096 = vmatpush2.bf16.msra.mxu0 0
  %1097 = vmatprep.subr.bf16.mxu0 0
  %1098 = vmatpush2.bf16.msra.mxu0 0
  %1099 = vmatprep.subr.bf16.mxu0 0
  %1100 = vmatpush2.bf16.msra.mxu0 0
  %1101 = vmatprep.subr.bf16.mxu0 0
  %1102 = vmatpush2.bf16.msra.mxu0 0
  %1103 = vmatprep.mubr.bf16.mxu0 0
  %1104 = vmatmul.mubr.bf16.gmra.mxu0 %v1019
  %v1105 = vpop.f32.mrf.mxu0
  %v1106 = vadd.f32 0.0, %v1105
  %v1107 = vpop.f32.mrf.mxu0
  %v1108 = vpop.f32.mrf.mxu0
  %v1109 = vpop.f32.mrf.mxu0
  %1110 = vdwg.mxu0
  %v1111 = vadd.f32 %v986, %v1065
  %v1112 = vadd.f32 %v987, %v1067
  %v1113 = vadd.f32 %v988, %v1106
  %s1114 = scalar_lea.vmem %s0, 6
  %v1115 = vld [vmem:[%s1114] sm:$0x3f]
  %v1117 = vcombine.high %v1115, %v1115
  %v1119 = vunpack.c.l.s4 1983009808
  %v1120 = vunpack.c.0.s8 %v1119
  %v1121 = vlaneseq
  %v1122 = vshrl.u32 %v1121, 7
  %v1123 = vsub.s32 %v1120, %v1122
  %v1124 = vrot.slane %v1115, %v1123
  %v1126 = vunpack.c.l.s4 1983009808
  %v1127 = vunpack.c.0.s8 %v1126
  %v1128 = vlaneseq
  %v1129 = vshrl.u32 %v1128, 7
  %v1130 = vsub.s32 %v1127, %v1129
  %v1131 = vrot.slane %v1117, %v1130
  %v1132 = vcombine.high %v1124, %v1124
  %1133 = vrot.lane.b32.xlu0 %v1124, 127
  %v1134 = vpop.permute.xlu0 %1133
  %1135 = vrot.lane.b32.xlu0 %v1132, 127
  %v1136 = vpop.permute.xlu0 %1135
  %1137 = vrot.lane.b32.xlu0 %v1131, 127
  %v1138 = vpop.permute.xlu0 %1137
  %v1139 = vsel %vm48, %v1134, %v1136
  %v1140 = vsel %vm48, %v1136, %v1138
  %v1142 = vsel %vm55, %v1139, 0
  %v1145 = vsel %vm55, %v1140, 0
  %v1148 = vsel %vm55, %v1138, 0
  %1150 = vmatprep.subr.bf16.mxu0 0
  %1151 = vmatpush1.bf16.msra.mxu0 0
  %1152 = vmatprep.subr.bf16.mxu0 0
  %1153 = vmatpush1.bf16.msra.mxu0 0
  %1154 = vmatprep.subr.bf16.mxu0 0
  %1155 = vmatpush1.bf16.msra.mxu0 0
  %1156 = vmatprep.subr.bf16.mxu0 0
  %1157 = vmatpush1.bf16.msra.mxu0 0
  %1158 = vmatprep.subr.bf16.mxu0 0
  %1159 = vmatpush1.bf16.msra.mxu0 0
  %1160 = vmatprep.subr.bf16.mxu0 0
  %1161 = vmatpush1.bf16.msra.mxu0 0
  %1162 = vmatprep.subr.bf16.mxu0 0
  %1163 = vmatpush1.bf16.msra.mxu0 0
  %1164 = vmatprep.subr.bf16.mxu0 %v1145
  %1165 = vmatpush1.bf16.msra.mxu0 %v1142
  %1166 = vmatprep.subr.bf16.mxu0 0
  %1167 = vmatpush2.bf16.msra.mxu0 0
  %1168 = vmatprep.subr.bf16.mxu0 0
  %1169 = vmatpush2.bf16.msra.mxu0 0
  %1170 = vmatprep.subr.bf16.mxu0 0
  %1171 = vmatpush2.bf16.msra.mxu0 0
  %1172 = vmatprep.subr.bf16.mxu0 0
  %1173 = vmatpush2.bf16.msra.mxu0 0
  %1174 = vmatprep.subr.bf16.mxu0 0
  %1175 = vmatpush2.bf16.msra.mxu0 0
  %1176 = vmatprep.subr.bf16.mxu0 0
  %1177 = vmatpush2.bf16.msra.mxu0 0
  %1178 = vmatprep.subr.bf16.mxu0 0
  %1179 = vmatpush2.bf16.msra.mxu0 0
  %1180 = vmatprep.subr.bf16.mxu0 0
  %1181 = vmatpush2.bf16.msra.mxu0 0
  %1182 = vmatprep.mubr.bf16.mxu0 0
  %1183 = vmatmul.mubr.bf16.gmra.mxu0 %v53
  %v1184 = vpop.f32.mrf.mxu0
  %v1185 = vadd.f32 0.0, %v1184
  %v1186 = vpop.f32.mrf.mxu0
  %v1187 = vadd.f32 0.0, %v1186
  %v1188 = vpop.f32.mrf.mxu0
  %v1189 = vpop.f32.mrf.mxu0
  %1190 = vdwg.mxu0
  %1191 = vmatprep.subr.bf16.mxu0 0
  %1192 = vmatpush1.bf16.msra.mxu0 0
  %1193 = vmatprep.subr.bf16.mxu0 0
  %1194 = vmatpush1.bf16.msra.mxu0 0
  %1195 = vmatprep.subr.bf16.mxu0 0
  %1196 = vmatpush1.bf16.msra.mxu0 0
  %1197 = vmatprep.subr.bf16.mxu0 0
  %1198 = vmatpush1.bf16.msra.mxu0 0
  %1199 = vmatprep.subr.bf16.mxu0 0
  %1200 = vmatpush1.bf16.msra.mxu0 0
  %1201 = vmatprep.subr.bf16.mxu0 0
  %1202 = vmatpush1.bf16.msra.mxu0 0
  %1203 = vmatprep.subr.bf16.mxu0 0
  %1204 = vmatpush1.bf16.msra.mxu0 0
  %1205 = vmatprep.subr.bf16.mxu0 0
  %1206 = vmatpush1.bf16.msra.mxu0 %v1148
  %1207 = vmatprep.subr.bf16.mxu0 0
  %1208 = vmatpush2.bf16.msra.mxu0 0
  %1209 = vmatprep.subr.bf16.mxu0 0
  %1210 = vmatpush2.bf16.msra.mxu0 0
  %1211 = vmatprep.subr.bf16.mxu0 0
  %1212 = vmatpush2.bf16.msra.mxu0 0
  %1213 = vmatprep.subr.bf16.mxu0 0
  %1214 = vmatpush2.bf16.msra.mxu0 0
  %1215 = vmatprep.subr.bf16.mxu0 0
  %1216 = vmatpush2.bf16.msra.mxu0 0
  %1217 = vmatprep.subr.bf16.mxu0 0
  %1218 = vmatpush2.bf16.msra.mxu0 0
  %1219 = vmatprep.subr.bf16.mxu0 0
  %1220 = vmatpush2.bf16.msra.mxu0 0
  %1221 = vmatprep.subr.bf16.mxu0 0
  %1222 = vmatpush2.bf16.msra.mxu0 0
  %1223 = vmatprep.mubr.bf16.mxu0 0
  %1224 = vmatmul.mubr.bf16.gmra.mxu0 %v53
  %v1225 = vpop.f32.mrf.mxu0
  %v1226 = vadd.f32 0.0, %v1225
  %v1227 = vpop.f32.mrf.mxu0
  %v1228 = vpop.f32.mrf.mxu0
  %v1229 = vpop.f32.mrf.mxu0
  %1230 = vdwg.mxu0
  %v1232 = vsel %vm55, %v1124, 0
  %v1235 = vsel %vm55, %v1132, 0
  %v1238 = vsel %vm55, %v1131, 0
  %1240 = vmatprep.subr.bf16.mxu0 0
  %1241 = vmatpush1.bf16.msra.mxu0 0
  %1242 = vmatprep.subr.bf16.mxu0 0
  %1243 = vmatpush1.bf16.msra.mxu0 0
  %1244 = vmatprep.subr.bf16.mxu0 0
  %1245 = vmatpush1.bf16.msra.mxu0 0
  %1246 = vmatprep.subr.bf16.mxu0 0
  %1247 = vmatpush1.bf16.msra.mxu0 0
  %1248 = vmatprep.subr.bf16.mxu0 0
  %1249 = vmatpush1.bf16.msra.mxu0 0
  %1250 = vmatprep.subr.bf16.mxu0 0
  %1251 = vmatpush1.bf16.msra.mxu0 0
  %1252 = vmatprep.subr.bf16.mxu0 0
  %1253 = vmatpush1.bf16.msra.mxu0 0
  %1254 = vmatprep.subr.bf16.mxu0 %v1235
  %1255 = vmatpush1.bf16.msra.mxu0 %v1232
  %1256 = vmatprep.subr.bf16.mxu0 0
  %1257 = vmatpush2.bf16.msra.mxu0 0
  %1258 = vmatprep.subr.bf16.mxu0 0
  %1259 = vmatpush2.bf16.msra.mxu0 0
  %1260 = vmatprep.subr.bf16.mxu0 0
  %1261 = vmatpush2.bf16.msra.mxu0 0
  %1262 = vmatprep.subr.bf16.mxu0 0
  %1263 = vmatpush2.bf16.msra.mxu0 0
  %1264 = vmatprep.subr.bf16.mxu0 0
  %1265 = vmatpush2.bf16.msra.mxu0 0
  %1266 = vmatprep.subr.bf16.mxu0 0
  %1267 = vmatpush2.bf16.msra.mxu0 0
  %1268 = vmatprep.subr.bf16.mxu0 0
  %1269 = vmatpush2.bf16.msra.mxu0 0
  %1270 = vmatprep.subr.bf16.mxu0 0
  %1271 = vmatpush2.bf16.msra.mxu0 0
  %1272 = vmatprep.mubr.bf16.mxu0 0
  %1273 = vmatmul.mubr.bf16.gmra.mxu0 %v147
  %v1274 = vpop.f32.mrf.mxu0
  %v1275 = vadd.f32 %v1185, %v1274
  %v1276 = vpop.f32.mrf.mxu0
  %v1277 = vadd.f32 %v1187, %v1276
  %v1278 = vpop.f32.mrf.mxu0
  %v1279 = vpop.f32.mrf.mxu0
  %1280 = vdwg.mxu0
  %1281 = vmatprep.subr.bf16.mxu0 0
  %1282 = vmatpush1.bf16.msra.mxu0 0
  %1283 = vmatprep.subr.bf16.mxu0 0
  %1284 = vmatpush1.bf16.msra.mxu0 0
  %1285 = vmatprep.subr.bf16.mxu0 0
  %1286 = vmatpush1.bf16.msra.mxu0 0
  %1287 = vmatprep.subr.bf16.mxu0 0
  %1288 = vmatpush1.bf16.msra.mxu0 0
  %1289 = vmatprep.subr.bf16.mxu0 0
  %1290 = vmatpush1.bf16.msra.mxu0 0
  %1291 = vmatprep.subr.bf16.mxu0 0
  %1292 = vmatpush1.bf16.msra.mxu0 0
  %1293 = vmatprep.subr.bf16.mxu0 0
  %1294 = vmatpush1.bf16.msra.mxu0 0
  %1295 = vmatprep.subr.bf16.mxu0 0
  %1296 = vmatpush1.bf16.msra.mxu0 %v1238
  %1297 = vmatprep.subr.bf16.mxu0 0
  %1298 = vmatpush2.bf16.msra.mxu0 0
  %1299 = vmatprep.subr.bf16.mxu0 0
  %1300 = vmatpush2.bf16.msra.mxu0 0
  %1301 = vmatprep.subr.bf16.mxu0 0
  %1302 = vmatpush2.bf16.msra.mxu0 0
  %1303 = vmatprep.subr.bf16.mxu0 0
  %1304 = vmatpush2.bf16.msra.mxu0 0
  %1305 = vmatprep.subr.bf16.mxu0 0
  %1306 = vmatpush2.bf16.msra.mxu0 0
  %1307 = vmatprep.subr.bf16.mxu0 0
  %1308 = vmatpush2.bf16.msra.mxu0 0
  %1309 = vmatprep.subr.bf16.mxu0 0
  %1310 = vmatpush2.bf16.msra.mxu0 0
  %1311 = vmatprep.subr.bf16.mxu0 0
  %1312 = vmatpush2.bf16.msra.mxu0 0
  %1313 = vmatprep.mubr.bf16.mxu0 0
  %1314 = vmatmul.mubr.bf16.gmra.mxu0 %v147
  %v1315 = vpop.f32.mrf.mxu0
  %v1316 = vadd.f32 %v1226, %v1315
  %v1317 = vpop.f32.mrf.mxu0
  %v1318 = vpop.f32.mrf.mxu0
  %v1319 = vpop.f32.mrf.mxu0
  %1320 = vdwg.mxu0
  %v1321 = vld [vmem:[%s1114] sm:$0x3f]
  %v1323 = vcombine.high %v1321, %v1321
  %v1325 = vunpack.c.l.s4 1983009808
  %v1326 = vunpack.c.0.s8 %v1325
  %v1327 = vlaneseq
  %v1328 = vshrl.u32 %v1327, 7
  %v1329 = vsub.s32 %v1326, %v1328
  %v1330 = vrot.slane %v1321, %v1329
  %v1332 = vunpack.c.l.s4 1983009808
  %v1333 = vunpack.c.0.s8 %v1332
  %v1334 = vlaneseq
  %v1335 = vshrl.u32 %v1334, 7
  %v1336 = vsub.s32 %v1333, %v1335
  %v1337 = vrot.slane %v1323, %v1336
  %v1338 = vcombine.high %v1330, %v1330
  %1339 = vrot.lane.b32.xlu0 %v1330, 126
  %v1340 = vpop.permute.xlu0 %1339
  %1341 = vrot.lane.b32.xlu0 %v1338, 126
  %v1342 = vpop.permute.xlu0 %1341
  %1343 = vrot.lane.b32.xlu0 %v1337, 126
  %v1344 = vpop.permute.xlu0 %1343
  %v1345 = vsel %vm265, %v1340, %v1342
  %v1346 = vsel %vm265, %v1342, %v1344
  %v1348 = vsel %vm55, %v1345, 0
  %v1351 = vsel %vm55, %v1346, 0
  %v1354 = vsel %vm55, %v1344, 0
  %1356 = vmatprep.subr.bf16.mxu0 0
  %1357 = vmatpush1.bf16.msra.mxu0 0
  %1358 = vmatprep.subr.bf16.mxu0 0
  %1359 = vmatpush1.bf16.msra.mxu0 0
  %1360 = vmatprep.subr.bf16.mxu0 0
  %1361 = vmatpush1.bf16.msra.mxu0 0
  %1362 = vmatprep.subr.bf16.mxu0 0
  %1363 = vmatpush1.bf16.msra.mxu0 0
  %1364 = vmatprep.subr.bf16.mxu0 0
  %1365 = vmatpush1.bf16.msra.mxu0 0
  %1366 = vmatprep.subr.bf16.mxu0 0
  %1367 = vmatpush1.bf16.msra.mxu0 0
  %1368 = vmatprep.subr.bf16.mxu0 0
  %1369 = vmatpush1.bf16.msra.mxu0 0
  %1370 = vmatprep.subr.bf16.mxu0 %v1351
  %1371 = vmatpush1.bf16.msra.mxu0 %v1348
  %1372 = vmatprep.subr.bf16.mxu0 0
  %1373 = vmatpush2.bf16.msra.mxu0 0
  %1374 = vmatprep.subr.bf16.mxu0 0
  %1375 = vmatpush2.bf16.msra.mxu0 0
  %1376 = vmatprep.subr.bf16.mxu0 0
  %1377 = vmatpush2.bf16.msra.mxu0 0
  %1378 = vmatprep.subr.bf16.mxu0 0
  %1379 = vmatpush2.bf16.msra.mxu0 0
  %1380 = vmatprep.subr.bf16.mxu0 0
  %1381 = vmatpush2.bf16.msra.mxu0 0
  %1382 = vmatprep.subr.bf16.mxu0 0
  %1383 = vmatpush2.bf16.msra.mxu0 0
  %1384 = vmatprep.subr.bf16.mxu0 0
  %1385 = vmatpush2.bf16.msra.mxu0 0
  %1386 = vmatprep.subr.bf16.mxu0 0
  %1387 = vmatpush2.bf16.msra.mxu0 0
  %1388 = vmatprep.mubr.bf16.mxu0 0
  %1389 = vmatmul.mubr.bf16.gmra.mxu0 %v269
  %v1390 = vpop.f32.mrf.mxu0
  %v1391 = vadd.f32 0.0, %v1390
  %v1392 = vpop.f32.mrf.mxu0
  %v1393 = vadd.f32 0.0, %v1392
  %v1394 = vpop.f32.mrf.mxu0
  %v1395 = vpop.f32.mrf.mxu0
  %1396 = vdwg.mxu0
  %1397 = vmatprep.subr.bf16.mxu0 0
  %1398 = vmatpush1.bf16.msra.mxu0 0
  %1399 = vmatprep.subr.bf16.mxu0 0
  %1400 = vmatpush1.bf16.msra.mxu0 0
  %1401 = vmatprep.subr.bf16.mxu0 0
  %1402 = vmatpush1.bf16.msra.mxu0 0
  %1403 = vmatprep.subr.bf16.mxu0 0
  %1404 = vmatpush1.bf16.msra.mxu0 0
  %1405 = vmatprep.subr.bf16.mxu0 0
  %1406 = vmatpush1.bf16.msra.mxu0 0
  %1407 = vmatprep.subr.bf16.mxu0 0
  %1408 = vmatpush1.bf16.msra.mxu0 0
  %1409 = vmatprep.subr.bf16.mxu0 0
  %1410 = vmatpush1.bf16.msra.mxu0 0
  %1411 = vmatprep.subr.bf16.mxu0 0
  %1412 = vmatpush1.bf16.msra.mxu0 %v1354
  %1413 = vmatprep.subr.bf16.mxu0 0
  %1414 = vmatpush2.bf16.msra.mxu0 0
  %1415 = vmatprep.subr.bf16.mxu0 0
  %1416 = vmatpush2.bf16.msra.mxu0 0
  %1417 = vmatprep.subr.bf16.mxu0 0
  %1418 = vmatpush2.bf16.msra.mxu0 0
  %1419 = vmatprep.subr.bf16.mxu0 0
  %1420 = vmatpush2.bf16.msra.mxu0 0
  %1421 = vmatprep.subr.bf16.mxu0 0
  %1422 = vmatpush2.bf16.msra.mxu0 0
  %1423 = vmatprep.subr.bf16.mxu0 0
  %1424 = vmatpush2.bf16.msra.mxu0 0
  %1425 = vmatprep.subr.bf16.mxu0 0
  %1426 = vmatpush2.bf16.msra.mxu0 0
  %1427 = vmatprep.subr.bf16.mxu0 0
  %1428 = vmatpush2.bf16.msra.mxu0 0
  %1429 = vmatprep.mubr.bf16.mxu0 0
  %1430 = vmatmul.mubr.bf16.gmra.mxu0 %v269
  %v1431 = vpop.f32.mrf.mxu0
  %v1432 = vadd.f32 0.0, %v1431
  %v1433 = vpop.f32.mrf.mxu0
  %v1434 = vpop.f32.mrf.mxu0
  %v1435 = vpop.f32.mrf.mxu0
  %1436 = vdwg.mxu0
  %v1437 = vadd.f32 %v1275, %v1391
  %v1438 = vadd.f32 %v1277, %v1393
  %v1439 = vadd.f32 %v1316, %v1432
  %v1440 = vld [vmem:[%s1114] sm:$0x3f]
  %v1442 = vcombine.high %v1440, %v1440
  %v1444 = vunpack.c.l.s4 1983009808
  %v1445 = vunpack.c.0.s8 %v1444
  %v1446 = vlaneseq
  %v1447 = vshrl.u32 %v1446, 7
  %v1448 = vsub.s32 %v1445, %v1447
  %v1449 = vrot.slane %v1440, %v1448
  %v1451 = vunpack.c.l.s4 1983009808
  %v1452 = vunpack.c.0.s8 %v1451
  %v1453 = vlaneseq
  %v1454 = vshrl.u32 %v1453, 7
  %v1455 = vsub.s32 %v1452, %v1454
  %v1456 = vrot.slane %v1442, %v1455
  %v1457 = vcombine.high %v1449, %v1449
  %1458 = vrot.lane.b32.xlu0 %v1449, 110
  %v1459 = vpop.permute.xlu0 %1458
  %1460 = vrot.lane.b32.xlu0 %v1457, 110
  %v1461 = vpop.permute.xlu0 %1460
  %1462 = vrot.lane.b32.xlu0 %v1456, 110
  %v1463 = vpop.permute.xlu0 %1462
  %v1464 = vsel %vm390, %v1459, %v1461
  %v1465 = vsel %vm390, %v1461, %v1463
  %v1467 = vsel %vm55, %v1464, 0
  %v1470 = vsel %vm55, %v1465, 0
  %v1473 = vsel %vm55, %v1463, 0
  %1475 = vmatprep.subr.bf16.mxu0 0
  %1476 = vmatpush1.bf16.msra.mxu0 0
  %1477 = vmatprep.subr.bf16.mxu0 0
  %1478 = vmatpush1.bf16.msra.mxu0 0
  %1479 = vmatprep.subr.bf16.mxu0 0
  %1480 = vmatpush1.bf16.msra.mxu0 0
  %1481 = vmatprep.subr.bf16.mxu0 0
  %1482 = vmatpush1.bf16.msra.mxu0 0
  %1483 = vmatprep.subr.bf16.mxu0 0
  %1484 = vmatpush1.bf16.msra.mxu0 0
  %1485 = vmatprep.subr.bf16.mxu0 0
  %1486 = vmatpush1.bf16.msra.mxu0 0
  %1487 = vmatprep.subr.bf16.mxu0 0
  %1488 = vmatpush1.bf16.msra.mxu0 0
  %1489 = vmatprep.subr.bf16.mxu0 %v1470
  %1490 = vmatpush1.bf16.msra.mxu0 %v1467
  %1491 = vmatprep.subr.bf16.mxu0 0
  %1492 = vmatpush2.bf16.msra.mxu0 0
  %1493 = vmatprep.subr.bf16.mxu0 0
  %1494 = vmatpush2.bf16.msra.mxu0 0
  %1495 = vmatprep.subr.bf16.mxu0 0
  %1496 = vmatpush2.bf16.msra.mxu0 0
  %1497 = vmatprep.subr.bf16.mxu0 0
  %1498 = vmatpush2.bf16.msra.mxu0 0
  %1499 = vmatprep.subr.bf16.mxu0 0
  %1500 = vmatpush2.bf16.msra.mxu0 0
  %1501 = vmatprep.subr.bf16.mxu0 0
  %1502 = vmatpush2.bf16.msra.mxu0 0
  %1503 = vmatprep.subr.bf16.mxu0 0
  %1504 = vmatpush2.bf16.msra.mxu0 0
  %1505 = vmatprep.subr.bf16.mxu0 0
  %1506 = vmatpush2.bf16.msra.mxu0 0
  %1507 = vmatprep.mubr.bf16.mxu0 0
  %1508 = vmatmul.mubr.bf16.gmra.mxu0 %v394
  %v1509 = vpop.f32.mrf.mxu0
  %v1510 = vadd.f32 0.0, %v1509
  %v1511 = vpop.f32.mrf.mxu0
  %v1512 = vadd.f32 0.0, %v1511
  %v1513 = vpop.f32.mrf.mxu0
  %v1514 = vpop.f32.mrf.mxu0
  %1515 = vdwg.mxu0
  %1516 = vmatprep.subr.bf16.mxu0 0
  %1517 = vmatpush1.bf16.msra.mxu0 0
  %1518 = vmatprep.subr.bf16.mxu0 0
  %1519 = vmatpush1.bf16.msra.mxu0 0
  %1520 = vmatprep.subr.bf16.mxu0 0
  %1521 = vmatpush1.bf16.msra.mxu0 0
  %1522 = vmatprep.subr.bf16.mxu0 0
  %1523 = vmatpush1.bf16.msra.mxu0 0
  %1524 = vmatprep.subr.bf16.mxu0 0
  %1525 = vmatpush1.bf16.msra.mxu0 0
  %1526 = vmatprep.subr.bf16.mxu0 0
  %1527 = vmatpush1.bf16.msra.mxu0 0
  %1528 = vmatprep.subr.bf16.mxu0 0
  %1529 = vmatpush1.bf16.msra.mxu0 0
  %1530 = vmatprep.subr.bf16.mxu0 0
  %1531 = vmatpush1.bf16.msra.mxu0 %v1473
  %1532 = vmatprep.subr.bf16.mxu0 0
  %1533 = vmatpush2.bf16.msra.mxu0 0
  %1534 = vmatprep.subr.bf16.mxu0 0
  %1535 = vmatpush2.bf16.msra.mxu0 0
  %1536 = vmatprep.subr.bf16.mxu0 0
  %1537 = vmatpush2.bf16.msra.mxu0 0
  %1538 = vmatprep.subr.bf16.mxu0 0
  %1539 = vmatpush2.bf16.msra.mxu0 0
  %1540 = vmatprep.subr.bf16.mxu0 0
  %1541 = vmatpush2.bf16.msra.mxu0 0
  %1542 = vmatprep.subr.bf16.mxu0 0
  %1543 = vmatpush2.bf16.msra.mxu0 0
  %1544 = vmatprep.subr.bf16.mxu0 0
  %1545 = vmatpush2.bf16.msra.mxu0 0
  %1546 = vmatprep.subr.bf16.mxu0 0
  %1547 = vmatpush2.bf16.msra.mxu0 0
  %1548 = vmatprep.mubr.bf16.mxu0 0
  %1549 = vmatmul.mubr.bf16.gmra.mxu0 %v394
  %v1550 = vpop.f32.mrf.mxu0
  %v1551 = vadd.f32 0.0, %v1550
  %v1552 = vpop.f32.mrf.mxu0
  %v1553 = vpop.f32.mrf.mxu0
  %v1554 = vpop.f32.mrf.mxu0
  %1555 = vdwg.mxu0
  %v1556 = vadd.f32 %v1437, %v1510
  %v1557 = vadd.f32 %v1438, %v1512
  %v1558 = vadd.f32 %v1439, %v1551
  %v1559 = vld [vmem:[%s1114] sm:$0x3f]
  %v1561 = vcombine.high %v1559, %v1559
  %v1563 = vunpack.c.l.s4 1983009808
  %v1564 = vunpack.c.0.s8 %v1563
  %v1565 = vlaneseq
  %v1566 = vshrl.u32 %v1565, 7
  %v1567 = vsub.s32 %v1564, %v1566
  %v1568 = vrot.slane %v1559, %v1567
  %v1570 = vunpack.c.l.s4 1983009808
  %v1571 = vunpack.c.0.s8 %v1570
  %v1572 = vlaneseq
  %v1573 = vshrl.u32 %v1572, 7
  %v1574 = vsub.s32 %v1571, %v1573
  %v1575 = vrot.slane %v1561, %v1574
  %v1576 = vcombine.high %v1568, %v1568
  %1577 = vrot.lane.b32.xlu0 %v1568, 109
  %v1578 = vpop.permute.xlu0 %1577
  %1579 = vrot.lane.b32.xlu0 %v1576, 109
  %v1580 = vpop.permute.xlu0 %1579
  %1581 = vrot.lane.b32.xlu0 %v1575, 109
  %v1582 = vpop.permute.xlu0 %1581
  %v1583 = vsel %vm515, %v1578, %v1580
  %v1584 = vsel %vm515, %v1580, %v1582
  %v1586 = vsel %vm55, %v1583, 0
  %v1589 = vsel %vm55, %v1584, 0
  %v1592 = vsel %vm55, %v1582, 0
  %1594 = vmatprep.subr.bf16.mxu0 0
  %1595 = vmatpush1.bf16.msra.mxu0 0
  %1596 = vmatprep.subr.bf16.mxu0 0
  %1597 = vmatpush1.bf16.msra.mxu0 0
  %1598 = vmatprep.subr.bf16.mxu0 0
  %1599 = vmatpush1.bf16.msra.mxu0 0
  %1600 = vmatprep.subr.bf16.mxu0 0
  %1601 = vmatpush1.bf16.msra.mxu0 0
  %1602 = vmatprep.subr.bf16.mxu0 0
  %1603 = vmatpush1.bf16.msra.mxu0 0
  %1604 = vmatprep.subr.bf16.mxu0 0
  %1605 = vmatpush1.bf16.msra.mxu0 0
  %1606 = vmatprep.subr.bf16.mxu0 0
  %1607 = vmatpush1.bf16.msra.mxu0 0
  %1608 = vmatprep.subr.bf16.mxu0 %v1589
  %1609 = vmatpush1.bf16.msra.mxu0 %v1586
  %1610 = vmatprep.subr.bf16.mxu0 0
  %1611 = vmatpush2.bf16.msra.mxu0 0
  %1612 = vmatprep.subr.bf16.mxu0 0
  %1613 = vmatpush2.bf16.msra.mxu0 0
  %1614 = vmatprep.subr.bf16.mxu0 0
  %1615 = vmatpush2.bf16.msra.mxu0 0
  %1616 = vmatprep.subr.bf16.mxu0 0
  %1617 = vmatpush2.bf16.msra.mxu0 0
  %1618 = vmatprep.subr.bf16.mxu0 0
  %1619 = vmatpush2.bf16.msra.mxu0 0
  %1620 = vmatprep.subr.bf16.mxu0 0
  %1621 = vmatpush2.bf16.msra.mxu0 0
  %1622 = vmatprep.subr.bf16.mxu0 0
  %1623 = vmatpush2.bf16.msra.mxu0 0
  %1624 = vmatprep.subr.bf16.mxu0 0
  %1625 = vmatpush2.bf16.msra.mxu0 0
  %1626 = vmatprep.mubr.bf16.mxu0 0
  %1627 = vmatmul.mubr.bf16.gmra.mxu0 %v519
  %v1628 = vpop.f32.mrf.mxu0
  %v1629 = vadd.f32 0.0, %v1628
  %v1630 = vpop.f32.mrf.mxu0
  %v1631 = vadd.f32 0.0, %v1630
  %v1632 = vpop.f32.mrf.mxu0
  %v1633 = vpop.f32.mrf.mxu0
  %1634 = vdwg.mxu0
  %1635 = vmatprep.subr.bf16.mxu0 0
  %1636 = vmatpush1.bf16.msra.mxu0 0
  %1637 = vmatprep.subr.bf16.mxu0 0
  %1638 = vmatpush1.bf16.msra.mxu0 0
  %1639 = vmatprep.subr.bf16.mxu0 0
  %1640 = vmatpush1.bf16.msra.mxu0 0
  %1641 = vmatprep.subr.bf16.mxu0 0
  %1642 = vmatpush1.bf16.msra.mxu0 0
  %1643 = vmatprep.subr.bf16.mxu0 0
  %1644 = vmatpush1.bf16.msra.mxu0 0
  %1645 = vmatprep.subr.bf16.mxu0 0
  %1646 = vmatpush1.bf16.msra.mxu0 0
  %1647 = vmatprep.subr.bf16.mxu0 0
  %1648 = vmatpush1.bf16.msra.mxu0 0
  %1649 = vmatprep.subr.bf16.mxu0 0
  %1650 = vmatpush1.bf16.msra.mxu0 %v1592
  %1651 = vmatprep.subr.bf16.mxu0 0
  %1652 = vmatpush2.bf16.msra.mxu0 0
  %1653 = vmatprep.subr.bf16.mxu0 0
  %1654 = vmatpush2.bf16.msra.mxu0 0
  %1655 = vmatprep.subr.bf16.mxu0 0
  %1656 = vmatpush2.bf16.msra.mxu0 0
  %1657 = vmatprep.subr.bf16.mxu0 0
  %1658 = vmatpush2.bf16.msra.mxu0 0
  %1659 = vmatprep.subr.bf16.mxu0 0
  %1660 = vmatpush2.bf16.msra.mxu0 0
  %1661 = vmatprep.subr.bf16.mxu0 0
  %1662 = vmatpush2.bf16.msra.mxu0 0
  %1663 = vmatprep.subr.bf16.mxu0 0
  %1664 = vmatpush2.bf16.msra.mxu0 0
  %1665 = vmatprep.subr.bf16.mxu0 0
  %1666 = vmatpush2.bf16.msra.mxu0 0
  %1667 = vmatprep.mubr.bf16.mxu0 0
  %1668 = vmatmul.mubr.bf16.gmra.mxu0 %v519
  %v1669 = vpop.f32.mrf.mxu0
  %v1670 = vadd.f32 0.0, %v1669
  %v1671 = vpop.f32.mrf.mxu0
  %v1672 = vpop.f32.mrf.mxu0
  %v1673 = vpop.f32.mrf.mxu0
  %1674 = vdwg.mxu0
  %v1675 = vadd.f32 %v1556, %v1629
  %v1676 = vadd.f32 %v1557, %v1631
  %v1677 = vadd.f32 %v1558, %v1670
  %v1678 = vld [vmem:[%s1114] sm:$0x3f]
  %v1680 = vcombine.high %v1678, %v1678
  %v1682 = vunpack.c.l.s4 1983009808
  %v1683 = vunpack.c.0.s8 %v1682
  %v1684 = vlaneseq
  %v1685 = vshrl.u32 %v1684, 7
  %v1686 = vsub.s32 %v1683, %v1685
  %v1687 = vrot.slane %v1678, %v1686
  %v1689 = vunpack.c.l.s4 1983009808
  %v1690 = vunpack.c.0.s8 %v1689
  %v1691 = vlaneseq
  %v1692 = vshrl.u32 %v1691, 7
  %v1693 = vsub.s32 %v1690, %v1692
  %v1694 = vrot.slane %v1680, %v1693
  %v1695 = vcombine.high %v1687, %v1687
  %1696 = vrot.lane.b32.xlu0 %v1687, 108
  %v1697 = vpop.permute.xlu0 %1696
  %1698 = vrot.lane.b32.xlu0 %v1695, 108
  %v1699 = vpop.permute.xlu0 %1698
  %1700 = vrot.lane.b32.xlu0 %v1694, 108
  %v1701 = vpop.permute.xlu0 %1700
  %v1702 = vsel %vm640, %v1697, %v1699
  %v1703 = vsel %vm640, %v1699, %v1701
  %v1705 = vsel %vm55, %v1702, 0
  %v1708 = vsel %vm55, %v1703, 0
  %v1711 = vsel %vm55, %v1701, 0
  %1713 = vmatprep.subr.bf16.mxu0 0
  %1714 = vmatpush1.bf16.msra.mxu0 0
  %1715 = vmatprep.subr.bf16.mxu0 0
  %1716 = vmatpush1.bf16.msra.mxu0 0
  %1717 = vmatprep.subr.bf16.mxu0 0
  %1718 = vmatpush1.bf16.msra.mxu0 0
  %1719 = vmatprep.subr.bf16.mxu0 0
  %1720 = vmatpush1.bf16.msra.mxu0 0
  %1721 = vmatprep.subr.bf16.mxu0 0
  %1722 = vmatpush1.bf16.msra.mxu0 0
  %1723 = vmatprep.subr.bf16.mxu0 0
  %1724 = vmatpush1.bf16.msra.mxu0 0
  %1725 = vmatprep.subr.bf16.mxu0 0
  %1726 = vmatpush1.bf16.msra.mxu0 0
  %1727 = vmatprep.subr.bf16.mxu0 %v1708
  %1728 = vmatpush1.bf16.msra.mxu0 %v1705
  %1729 = vmatprep.subr.bf16.mxu0 0
  %1730 = vmatpush2.bf16.msra.mxu0 0
  %1731 = vmatprep.subr.bf16.mxu0 0
  %1732 = vmatpush2.bf16.msra.mxu0 0
  %1733 = vmatprep.subr.bf16.mxu0 0
  %1734 = vmatpush2.bf16.msra.mxu0 0
  %1735 = vmatprep.subr.bf16.mxu0 0
  %1736 = vmatpush2.bf16.msra.mxu0 0
  %1737 = vmatprep.subr.bf16.mxu0 0
  %1738 = vmatpush2.bf16.msra.mxu0 0
  %1739 = vmatprep.subr.bf16.mxu0 0
  %1740 = vmatpush2.bf16.msra.mxu0 0
  %1741 = vmatprep.subr.bf16.mxu0 0
  %1742 = vmatpush2.bf16.msra.mxu0 0
  %1743 = vmatprep.subr.bf16.mxu0 0
  %1744 = vmatpush2.bf16.msra.mxu0 0
  %1745 = vmatprep.mubr.bf16.mxu0 0
  %1746 = vmatmul.mubr.bf16.gmra.mxu0 %v644
  %v1747 = vpop.f32.mrf.mxu0
  %v1748 = vadd.f32 0.0, %v1747
  %v1749 = vpop.f32.mrf.mxu0
  %v1750 = vadd.f32 0.0, %v1749
  %v1751 = vpop.f32.mrf.mxu0
  %v1752 = vpop.f32.mrf.mxu0
  %1753 = vdwg.mxu0
  %1754 = vmatprep.subr.bf16.mxu0 0
  %1755 = vmatpush1.bf16.msra.mxu0 0
  %1756 = vmatprep.subr.bf16.mxu0 0
  %1757 = vmatpush1.bf16.msra.mxu0 0
  %1758 = vmatprep.subr.bf16.mxu0 0
  %1759 = vmatpush1.bf16.msra.mxu0 0
  %1760 = vmatprep.subr.bf16.mxu0 0
  %1761 = vmatpush1.bf16.msra.mxu0 0
  %1762 = vmatprep.subr.bf16.mxu0 0
  %1763 = vmatpush1.bf16.msra.mxu0 0
  %1764 = vmatprep.subr.bf16.mxu0 0
  %1765 = vmatpush1.bf16.msra.mxu0 0
  %1766 = vmatprep.subr.bf16.mxu0 0
  %1767 = vmatpush1.bf16.msra.mxu0 0
  %1768 = vmatprep.subr.bf16.mxu0 0
  %1769 = vmatpush1.bf16.msra.mxu0 %v1711
  %1770 = vmatprep.subr.bf16.mxu0 0
  %1771 = vmatpush2.bf16.msra.mxu0 0
  %1772 = vmatprep.subr.bf16.mxu0 0
  %1773 = vmatpush2.bf16.msra.mxu0 0
  %1774 = vmatprep.subr.bf16.mxu0 0
  %1775 = vmatpush2.bf16.msra.mxu0 0
  %1776 = vmatprep.subr.bf16.mxu0 0
  %1777 = vmatpush2.bf16.msra.mxu0 0
  %1778 = vmatprep.subr.bf16.mxu0 0
  %1779 = vmatpush2.bf16.msra.mxu0 0
  %1780 = vmatprep.subr.bf16.mxu0 0
  %1781 = vmatpush2.bf16.msra.mxu0 0
  %1782 = vmatprep.subr.bf16.mxu0 0
  %1783 = vmatpush2.bf16.msra.mxu0 0
  %1784 = vmatprep.subr.bf16.mxu0 0
  %1785 = vmatpush2.bf16.msra.mxu0 0
  %1786 = vmatprep.mubr.bf16.mxu0 0
  %1787 = vmatmul.mubr.bf16.gmra.mxu0 %v644
  %v1788 = vpop.f32.mrf.mxu0
  %v1789 = vadd.f32 0.0, %v1788
  %v1790 = vpop.f32.mrf.mxu0
  %v1791 = vpop.f32.mrf.mxu0
  %v1792 = vpop.f32.mrf.mxu0
  %1793 = vdwg.mxu0
  %v1794 = vadd.f32 %v1675, %v1748
  %v1795 = vadd.f32 %v1676, %v1750
  %v1796 = vadd.f32 %v1677, %v1789
  %v1797 = vld [vmem:[%s1114] sm:$0x3f]
  %v1799 = vcombine.high %v1797, %v1797
  %v1801 = vunpack.c.l.s4 1983009808
  %v1802 = vunpack.c.0.s8 %v1801
  %v1803 = vlaneseq
  %v1804 = vshrl.u32 %v1803, 7
  %v1805 = vsub.s32 %v1802, %v1804
  %v1806 = vrot.slane %v1797, %v1805
  %v1808 = vunpack.c.l.s4 1983009808
  %v1809 = vunpack.c.0.s8 %v1808
  %v1810 = vlaneseq
  %v1811 = vshrl.u32 %v1810, 7
  %v1812 = vsub.s32 %v1809, %v1811
  %v1813 = vrot.slane %v1799, %v1812
  %v1814 = vcombine.high %v1806, %v1806
  %1815 = vrot.lane.b32.xlu0 %v1806, 92
  %v1816 = vpop.permute.xlu0 %1815
  %1817 = vrot.lane.b32.xlu0 %v1814, 92
  %v1818 = vpop.permute.xlu0 %1817
  %1819 = vrot.lane.b32.xlu0 %v1813, 92
  %v1820 = vpop.permute.xlu0 %1819
  %v1821 = vsel %vm765, %v1816, %v1818
  %v1822 = vsel %vm765, %v1818, %v1820
  %v1824 = vsel %vm55, %v1821, 0
  %v1827 = vsel %vm55, %v1822, 0
  %v1830 = vsel %vm55, %v1820, 0
  %1832 = vmatprep.subr.bf16.mxu0 0
  %1833 = vmatpush1.bf16.msra.mxu0 0
  %1834 = vmatprep.subr.bf16.mxu0 0
  %1835 = vmatpush1.bf16.msra.mxu0 0
  %1836 = vmatprep.subr.bf16.mxu0 0
  %1837 = vmatpush1.bf16.msra.mxu0 0
  %1838 = vmatprep.subr.bf16.mxu0 0
  %1839 = vmatpush1.bf16.msra.mxu0 0
  %1840 = vmatprep.subr.bf16.mxu0 0
  %1841 = vmatpush1.bf16.msra.mxu0 0
  %1842 = vmatprep.subr.bf16.mxu0 0
  %1843 = vmatpush1.bf16.msra.mxu0 0
  %1844 = vmatprep.subr.bf16.mxu0 0
  %1845 = vmatpush1.bf16.msra.mxu0 0
  %1846 = vmatprep.subr.bf16.mxu0 %v1827
  %1847 = vmatpush1.bf16.msra.mxu0 %v1824
  %1848 = vmatprep.subr.bf16.mxu0 0
  %1849 = vmatpush2.bf16.msra.mxu0 0
  %1850 = vmatprep.subr.bf16.mxu0 0
  %1851 = vmatpush2.bf16.msra.mxu0 0
  %1852 = vmatprep.subr.bf16.mxu0 0
  %1853 = vmatpush2.bf16.msra.mxu0 0
  %1854 = vmatprep.subr.bf16.mxu0 0
  %1855 = vmatpush2.bf16.msra.mxu0 0
  %1856 = vmatprep.subr.bf16.mxu0 0
  %1857 = vmatpush2.bf16.msra.mxu0 0
  %1858 = vmatprep.subr.bf16.mxu0 0
  %1859 = vmatpush2.bf16.msra.mxu0 0
  %1860 = vmatprep.subr.bf16.mxu0 0
  %1861 = vmatpush2.bf16.msra.mxu0 0
  %1862 = vmatprep.subr.bf16.mxu0 0
  %1863 = vmatpush2.bf16.msra.mxu0 0
  %1864 = vmatprep.mubr.bf16.mxu0 0
  %1865 = vmatmul.mubr.bf16.gmra.mxu0 %v769
  %v1866 = vpop.f32.mrf.mxu0
  %v1867 = vadd.f32 0.0, %v1866
  %v1868 = vpop.f32.mrf.mxu0
  %v1869 = vadd.f32 0.0, %v1868
  %v1870 = vpop.f32.mrf.mxu0
  %v1871 = vpop.f32.mrf.mxu0
  %1872 = vdwg.mxu0
  %1873 = vmatprep.subr.bf16.mxu0 0
  %1874 = vmatpush1.bf16.msra.mxu0 0
  %1875 = vmatprep.subr.bf16.mxu0 0
  %1876 = vmatpush1.bf16.msra.mxu0 0
  %1877 = vmatprep.subr.bf16.mxu0 0
  %1878 = vmatpush1.bf16.msra.mxu0 0
  %1879 = vmatprep.subr.bf16.mxu0 0
  %1880 = vmatpush1.bf16.msra.mxu0 0
  %1881 = vmatprep.subr.bf16.mxu0 0
  %1882 = vmatpush1.bf16.msra.mxu0 0
  %1883 = vmatprep.subr.bf16.mxu0 0
  %1884 = vmatpush1.bf16.msra.mxu0 0
  %1885 = vmatprep.subr.bf16.mxu0 0
  %1886 = vmatpush1.bf16.msra.mxu0 0
  %1887 = vmatprep.subr.bf16.mxu0 0
  %1888 = vmatpush1.bf16.msra.mxu0 %v1830
  %1889 = vmatprep.subr.bf16.mxu0 0
  %1890 = vmatpush2.bf16.msra.mxu0 0
  %1891 = vmatprep.subr.bf16.mxu0 0
  %1892 = vmatpush2.bf16.msra.mxu0 0
  %1893 = vmatprep.subr.bf16.mxu0 0
  %1894 = vmatpush2.bf16.msra.mxu0 0
  %1895 = vmatprep.subr.bf16.mxu0 0
  %1896 = vmatpush2.bf16.msra.mxu0 0
  %1897 = vmatprep.subr.bf16.mxu0 0
  %1898 = vmatpush2.bf16.msra.mxu0 0
  %1899 = vmatprep.subr.bf16.mxu0 0
  %1900 = vmatpush2.bf16.msra.mxu0 0
  %1901 = vmatprep.subr.bf16.mxu0 0
  %1902 = vmatpush2.bf16.msra.mxu0 0
  %1903 = vmatprep.subr.bf16.mxu0 0
  %1904 = vmatpush2.bf16.msra.mxu0 0
  %1905 = vmatprep.mubr.bf16.mxu0 0
  %1906 = vmatmul.mubr.bf16.gmra.mxu0 %v769
  %v1907 = vpop.f32.mrf.mxu0
  %v1908 = vadd.f32 0.0, %v1907
  %v1909 = vpop.f32.mrf.mxu0
  %v1910 = vpop.f32.mrf.mxu0
  %v1911 = vpop.f32.mrf.mxu0
  %1912 = vdwg.mxu0
  %v1913 = vadd.f32 %v1794, %v1867
  %v1914 = vadd.f32 %v1795, %v1869
  %v1915 = vadd.f32 %v1796, %v1908
  %v1916 = vld [vmem:[%s1114] sm:$0x3f]
  %v1918 = vcombine.high %v1916, %v1916
  %v1920 = vunpack.c.l.s4 1983009808
  %v1921 = vunpack.c.0.s8 %v1920
  %v1922 = vlaneseq
  %v1923 = vshrl.u32 %v1922, 7
  %v1924 = vsub.s32 %v1921, %v1923
  %v1925 = vrot.slane %v1916, %v1924
  %v1927 = vunpack.c.l.s4 1983009808
  %v1928 = vunpack.c.0.s8 %v1927
  %v1929 = vlaneseq
  %v1930 = vshrl.u32 %v1929, 7
  %v1931 = vsub.s32 %v1928, %v1930
  %v1932 = vrot.slane %v1918, %v1931
  %v1933 = vcombine.high %v1925, %v1925
  %1934 = vrot.lane.b32.xlu0 %v1925, 91
  %v1935 = vpop.permute.xlu0 %1934
  %1936 = vrot.lane.b32.xlu0 %v1933, 91
  %v1937 = vpop.permute.xlu0 %1936
  %1938 = vrot.lane.b32.xlu0 %v1932, 91
  %v1939 = vpop.permute.xlu0 %1938
  %v1940 = vsel %vm890, %v1935, %v1937
  %v1941 = vsel %vm890, %v1937, %v1939
  %v1943 = vsel %vm55, %v1940, 0
  %v1946 = vsel %vm55, %v1941, 0
  %v1949 = vsel %vm55, %v1939, 0
  %1951 = vmatprep.subr.bf16.mxu0 0
  %1952 = vmatpush1.bf16.msra.mxu0 0
  %1953 = vmatprep.subr.bf16.mxu0 0
  %1954 = vmatpush1.bf16.msra.mxu0 0
  %1955 = vmatprep.subr.bf16.mxu0 0
  %1956 = vmatpush1.bf16.msra.mxu0 0
  %1957 = vmatprep.subr.bf16.mxu0 0
  %1958 = vmatpush1.bf16.msra.mxu0 0
  %1959 = vmatprep.subr.bf16.mxu0 0
  %1960 = vmatpush1.bf16.msra.mxu0 0
  %1961 = vmatprep.subr.bf16.mxu0 0
  %1962 = vmatpush1.bf16.msra.mxu0 0
  %1963 = vmatprep.subr.bf16.mxu0 0
  %1964 = vmatpush1.bf16.msra.mxu0 0
  %1965 = vmatprep.subr.bf16.mxu0 %v1946
  %1966 = vmatpush1.bf16.msra.mxu0 %v1943
  %1967 = vmatprep.subr.bf16.mxu0 0
  %1968 = vmatpush2.bf16.msra.mxu0 0
  %1969 = vmatprep.subr.bf16.mxu0 0
  %1970 = vmatpush2.bf16.msra.mxu0 0
  %1971 = vmatprep.subr.bf16.mxu0 0
  %1972 = vmatpush2.bf16.msra.mxu0 0
  %1973 = vmatprep.subr.bf16.mxu0 0
  %1974 = vmatpush2.bf16.msra.mxu0 0
  %1975 = vmatprep.subr.bf16.mxu0 0
  %1976 = vmatpush2.bf16.msra.mxu0 0
  %1977 = vmatprep.subr.bf16.mxu0 0
  %1978 = vmatpush2.bf16.msra.mxu0 0
  %1979 = vmatprep.subr.bf16.mxu0 0
  %1980 = vmatpush2.bf16.msra.mxu0 0
  %1981 = vmatprep.subr.bf16.mxu0 0
  %1982 = vmatpush2.bf16.msra.mxu0 0
  %1983 = vmatprep.mubr.bf16.mxu0 0
  %1984 = vmatmul.mubr.bf16.gmra.mxu0 %v894
  %v1985 = vpop.f32.mrf.mxu0
  %v1986 = vadd.f32 0.0, %v1985
  %v1987 = vpop.f32.mrf.mxu0
  %v1988 = vadd.f32 0.0, %v1987
  %v1989 = vpop.f32.mrf.mxu0
  %v1990 = vpop.f32.mrf.mxu0
  %1991 = vdwg.mxu0
  %1992 = vmatprep.subr.bf16.mxu0 0
  %1993 = vmatpush1.bf16.msra.mxu0 0
  %1994 = vmatprep.subr.bf16.mxu0 0
  %1995 = vmatpush1.bf16.msra.mxu0 0
  %1996 = vmatprep.subr.bf16.mxu0 0
  %1997 = vmatpush1.bf16.msra.mxu0 0
  %1998 = vmatprep.subr.bf16.mxu0 0
  %1999 = vmatpush1.bf16.msra.mxu0 0
  %2000 = vmatprep.subr.bf16.mxu0 0
  %2001 = vmatpush1.bf16.msra.mxu0 0
  %2002 = vmatprep.subr.bf16.mxu0 0
  %2003 = vmatpush1.bf16.msra.mxu0 0
  %2004 = vmatprep.subr.bf16.mxu0 0
  %2005 = vmatpush1.bf16.msra.mxu0 0
  %2006 = vmatprep.subr.bf16.mxu0 0
  %2007 = vmatpush1.bf16.msra.mxu0 %v1949
  %2008 = vmatprep.subr.bf16.mxu0 0
  %2009 = vmatpush2.bf16.msra.mxu0 0
  %2010 = vmatprep.subr.bf16.mxu0 0
  %2011 = vmatpush2.bf16.msra.mxu0 0
  %2012 = vmatprep.subr.bf16.mxu0 0
  %2013 = vmatpush2.bf16.msra.mxu0 0
  %2014 = vmatprep.subr.bf16.mxu0 0
  %2015 = vmatpush2.bf16.msra.mxu0 0
  %2016 = vmatprep.subr.bf16.mxu0 0
  %2017 = vmatpush2.bf16.msra.mxu0 0
  %2018 = vmatprep.subr.bf16.mxu0 0
  %2019 = vmatpush2.bf16.msra.mxu0 0
  %2020 = vmatprep.subr.bf16.mxu0 0
  %2021 = vmatpush2.bf16.msra.mxu0 0
  %2022 = vmatprep.subr.bf16.mxu0 0
  %2023 = vmatpush2.bf16.msra.mxu0 0
  %2024 = vmatprep.mubr.bf16.mxu0 0
  %2025 = vmatmul.mubr.bf16.gmra.mxu0 %v894
  %v2026 = vpop.f32.mrf.mxu0
  %v2027 = vadd.f32 0.0, %v2026
  %v2028 = vpop.f32.mrf.mxu0
  %v2029 = vpop.f32.mrf.mxu0
  %v2030 = vpop.f32.mrf.mxu0
  %2031 = vdwg.mxu0
  %v2032 = vadd.f32 %v1913, %v1986
  %v2033 = vadd.f32 %v1914, %v1988
  %v2034 = vadd.f32 %v1915, %v2027
  %v2035 = vld [vmem:[%s1114] sm:$0x3f]
  %v2037 = vcombine.high %v2035, %v2035
  %v2039 = vunpack.c.l.s4 1983009808
  %v2040 = vunpack.c.0.s8 %v2039
  %v2041 = vlaneseq
  %v2042 = vshrl.u32 %v2041, 7
  %v2043 = vsub.s32 %v2040, %v2042
  %v2044 = vrot.slane %v2035, %v2043
  %v2046 = vunpack.c.l.s4 1983009808
  %v2047 = vunpack.c.0.s8 %v2046
  %v2048 = vlaneseq
  %v2049 = vshrl.u32 %v2048, 7
  %v2050 = vsub.s32 %v2047, %v2049
  %v2051 = vrot.slane %v2037, %v2050
  %v2052 = vcombine.high %v2044, %v2044
  %2053 = vrot.lane.b32.xlu0 %v2044, 90
  %v2054 = vpop.permute.xlu0 %2053
  %2055 = vrot.lane.b32.xlu0 %v2052, 90
  %v2056 = vpop.permute.xlu0 %2055
  %2057 = vrot.lane.b32.xlu0 %v2051, 90
  %v2058 = vpop.permute.xlu0 %2057
  %v2059 = vsel %vm1015, %v2054, %v2056
  %v2060 = vsel %vm1015, %v2056, %v2058
  %v2062 = vsel %vm55, %v2059, 0
  %v2065 = vsel %vm55, %v2060, 0
  %v2068 = vsel %vm55, %v2058, 0
  %2070 = vmatprep.subr.bf16.mxu0 0
  %2071 = vmatpush1.bf16.msra.mxu0 0
  %2072 = vmatprep.subr.bf16.mxu0 0
  %2073 = vmatpush1.bf16.msra.mxu0 0
  %2074 = vmatprep.subr.bf16.mxu0 0
  %2075 = vmatpush1.bf16.msra.mxu0 0
  %2076 = vmatprep.subr.bf16.mxu0 0
  %2077 = vmatpush1.bf16.msra.mxu0 0
  %2078 = vmatprep.subr.bf16.mxu0 0
  %2079 = vmatpush1.bf16.msra.mxu0 0
  %2080 = vmatprep.subr.bf16.mxu0 0
  %2081 = vmatpush1.bf16.msra.mxu0 0
  %2082 = vmatprep.subr.bf16.mxu0 0
  %2083 = vmatpush1.bf16.msra.mxu0 0
  %2084 = vmatprep.subr.bf16.mxu0 %v2065
  %2085 = vmatpush1.bf16.msra.mxu0 %v2062
  %2086 = vmatprep.subr.bf16.mxu0 0
  %2087 = vmatpush2.bf16.msra.mxu0 0
  %2088 = vmatprep.subr.bf16.mxu0 0
  %2089 = vmatpush2.bf16.msra.mxu0 0
  %2090 = vmatprep.subr.bf16.mxu0 0
  %2091 = vmatpush2.bf16.msra.mxu0 0
  %2092 = vmatprep.subr.bf16.mxu0 0
  %2093 = vmatpush2.bf16.msra.mxu0 0
  %2094 = vmatprep.subr.bf16.mxu0 0
  %2095 = vmatpush2.bf16.msra.mxu0 0
  %2096 = vmatprep.subr.bf16.mxu0 0
  %2097 = vmatpush2.bf16.msra.mxu0 0
  %2098 = vmatprep.subr.bf16.mxu0 0
  %2099 = vmatpush2.bf16.msra.mxu0 0
  %2100 = vmatprep.subr.bf16.mxu0 0
  %2101 = vmatpush2.bf16.msra.mxu0 0
  %2102 = vmatprep.mubr.bf16.mxu0 0
  %2103 = vmatmul.mubr.bf16.gmra.mxu0 %v1019
  %v2104 = vpop.f32.mrf.mxu0
  %v2105 = vadd.f32 0.0, %v2104
  %v2106 = vpop.f32.mrf.mxu0
  %v2107 = vadd.f32 0.0, %v2106
  %v2108 = vpop.f32.mrf.mxu0
  %v2109 = vpop.f32.mrf.mxu0
  %2110 = vdwg.mxu0
  %2111 = vmatprep.subr.bf16.mxu0 0
  %2112 = vmatpush1.bf16.msra.mxu0 0
  %2113 = vmatprep.subr.bf16.mxu0 0
  %2114 = vmatpush1.bf16.msra.mxu0 0
  %2115 = vmatprep.subr.bf16.mxu0 0
  %2116 = vmatpush1.bf16.msra.mxu0 0
  %2117 = vmatprep.subr.bf16.mxu0 0
  %2118 = vmatpush1.bf16.msra.mxu0 0
  %2119 = vmatprep.subr.bf16.mxu0 0
  %2120 = vmatpush1.bf16.msra.mxu0 0
  %2121 = vmatprep.subr.bf16.mxu0 0
  %2122 = vmatpush1.bf16.msra.mxu0 0
  %2123 = vmatprep.subr.bf16.mxu0 0
  %2124 = vmatpush1.bf16.msra.mxu0 0
  %2125 = vmatprep.subr.bf16.mxu0 0
  %2126 = vmatpush1.bf16.msra.mxu0 %v2068
  %2127 = vmatprep.subr.bf16.mxu0 0
  %2128 = vmatpush2.bf16.msra.mxu0 0
  %2129 = vmatprep.subr.bf16.mxu0 0
  %2130 = vmatpush2.bf16.msra.mxu0 0
  %2131 = vmatprep.subr.bf16.mxu0 0
  %2132 = vmatpush2.bf16.msra.mxu0 0
  %2133 = vmatprep.subr.bf16.mxu0 0
  %2134 = vmatpush2.bf16.msra.mxu0 0
  %2135 = vmatprep.subr.bf16.mxu0 0
  %2136 = vmatpush2.bf16.msra.mxu0 0
  %2137 = vmatprep.subr.bf16.mxu0 0
  %2138 = vmatpush2.bf16.msra.mxu0 0
  %2139 = vmatprep.subr.bf16.mxu0 0
  %2140 = vmatpush2.bf16.msra.mxu0 0
  %2141 = vmatprep.subr.bf16.mxu0 0
  %2142 = vmatpush2.bf16.msra.mxu0 0
  %2143 = vmatprep.mubr.bf16.mxu0 0
  %2144 = vmatmul.mubr.bf16.gmra.mxu0 %v1019
  %v2145 = vpop.f32.mrf.mxu0
  %v2146 = vadd.f32 0.0, %v2145
  %v2147 = vpop.f32.mrf.mxu0
  %v2148 = vpop.f32.mrf.mxu0
  %v2149 = vpop.f32.mrf.mxu0
  %2150 = vdwg.mxu0
  %v2151 = vadd.f32 %v2032, %v2105
  %v2152 = vadd.f32 %v2033, %v2107
  %v2153 = vadd.f32 %v2034, %v2146
  %v2154 = vld [vmem:[%s4] sm:$0x7]
  %v2156 = vlaneseq
  %v2157 = vshrl.u32 %v2156, 7
  %v2158 = vsub.s32 0, %v2157
  %v2159 = vrot.slane %v2154, %v2158
  %v2160 = vlaneseq
  %v2161 = vshrl.u32 %v2160, 7
  %v2162 = vsub.s32 1, %v2161
  %v2163 = vrot.slane %v2154, %v2162
  %v2164 = vlaneseq
  %v2165 = vshrl.u32 %v2164, 7
  %v2166 = vsub.s32 2, %v2165
  %v2167 = vrot.slane %v2154, %v2166
  %v2171 = vmul.f32 %v1111, %v2159
  %v2172 = vmul.f32 %v1112, %v2163
  %v2173 = vmul.f32 %v1113, %v2167
  %v2174 = vadd.f32 %v2171, %v2172
  %vm2175 = vcmask 261120
  %v2176 = vsel %vm2175, %v2173, 0.0
  %v2177 = vadd.f32 %v2174, %v2176
  %2178 = vadd.xlane.f32.xlu0 %v2177
  %v2179 = vpop.xlane.xlu0 %2178
  %v2180 = vadd.f32 %v2179, 0.0
  %v2181 = vmul.f32 %v2151, %v2159
  %v2182 = vmul.f32 %v2152, %v2163
  %v2183 = vmul.f32 %v2153, %v2167
  %v2184 = vadd.f32 %v2181, %v2182
  %v2185 = vsel %vm2175, %v2183, 0.0
  %v2186 = vadd.f32 %v2184, %v2185
  %2187 = vadd.xlane.f32.xlu0 %v2186
  %v2188 = vpop.xlane.xlu0 %2187
  %v2189 = vadd.f32 %v2180, %v2188
  %v2190 = vrcp.pop 512.0
  %v2191 = vmul.f32 %v2189, %v2190
  %v2192 = vsub.f32 %v1111, %v2191
  %v2193 = vsub.f32 %v1112, %v2191
  %v2194 = vsub.f32 %v1113, %v2191
  %v2195 = vmul.f32 %v2192, %v2192
  %v2196 = vmul.f32 %v2193, %v2193
  %v2197 = vmul.f32 %v2194, %v2194
  %v2198 = vmul.f32 %v2159, %v2195
  %v2199 = vmul.f32 %v2163, %v2196
  %v2200 = vmul.f32 %v2167, %v2197
  %v2201 = vadd.f32 %v2198, %v2199
  %v2202 = vsel %vm2175, %v2200, 0.0
  %v2203 = vadd.f32 %v2201, %v2202
  %2204 = vadd.xlane.f32.xlu0 %v2203
  %v2205 = vpop.xlane.xlu0 %2204
  %v2206 = vadd.f32 %v2205, 0.0
  %v2207 = vsub.f32 %v2151, %v2191
  %v2208 = vsub.f32 %v2152, %v2191
  %v2209 = vsub.f32 %v2153, %v2191
  %v2210 = vmul.f32 %v2207, %v2207
  %v2211 = vmul.f32 %v2208, %v2208
  %v2212 = vmul.f32 %v2209, %v2209
  %v2213 = vmul.f32 %v2159, %v2210
  %v2214 = vmul.f32 %v2163, %v2211
  %v2215 = vmul.f32 %v2167, %v2212
  %v2216 = vadd.f32 %v2213, %v2214
  %v2217 = vsel %vm2175, %v2215, 0.0
  %v2218 = vadd.f32 %v2216, %v2217
  %2219 = vadd.xlane.f32.xlu0 %v2218
  %v2220 = vpop.xlane.xlu0 %2219
  %v2221 = vadd.f32 %v2206, %v2220
  %v2222 = vmul.f32 %v2221, %v2190
  %v2223 = vadd.f32 %v2222, 1e-05
  %v2224 = vrsqrt.pop %v2223
  %v2225 = vld [vmem:[%s2] sm:$0xff]
  %v2226 = vmul.f32 %v2225, %v2224
  %v2227 = vld [vmem:[%s3] sm:$0xff]
  %v2228 = vmul.f32 %v2191, %v2226
  %v2229 = vsub.f32 %v2227, %v2228
  %2231 = vset.pattern.permute.xlu0 0
  %2232 = vperm.xlu0 %2231, %v2226
  %v2233 = vpop.permute.xlu0 %2232
  %v2235 = vmul.f32 %v1111, %v2233
  %v2236 = vmul.f32 %v1112, %v2233
  %v2237 = vmul.f32 %v1113, %v2233
  %2239 = vset.pattern.permute.xlu0 0
  %2240 = vperm.xlu0 %2239, %v2229
  %v2241 = vpop.permute.xlu0 %2240
  %v2243 = vadd.f32 %v2235, %v2241
  %v2244 = vadd.f32 %v2236, %v2241
  %v2245 = vadd.f32 %v2237, %v2241
  %v2246 = vmax.f32 %v2243, 0.0
  %v2247 = vmax.f32 %v2244, 0.0
  %v2248 = vmax.f32 %v2245, 0.0
  %2249 = vst [vmem:[%s5] sm:$0xff] %v2246
  %2250 = vst [vmem:[%s5 + $0x8] sm:$0xff] %v2247
  %2251 = vst.msk [vmem:[%s5 + $0x10] sm:$0xff] %vm2175, %v2248
  %v2252 = vmul.f32 %v2151, %v2233
  %v2253 = vmul.f32 %v2152, %v2233
  %v2254 = vmul.f32 %v2153, %v2233
  %v2255 = vadd.f32 %v2252, %v2241
  %v2256 = vadd.f32 %v2253, %v2241
  %v2257 = vadd.f32 %v2254, %v2241
  %v2258 = vmax.f32 %v2255, 0.0
  %v2259 = vmax.f32 %v2256, 0.0
  %v2260 = vmax.f32 %v2257, 0.0
  %s2261 = scalar_lea.vmem %s5, 24
  %2262 = vst [vmem:[%s2261] sm:$0xff] %v2258
  %2263 = vst [vmem:[%s2261 + $0x8] sm:$0xff] %v2259
  %2264 = vst.msk [vmem:[%s2261 + $0x10] sm:$0xff] %vm2175, %v2260
  // Predicated region
  $region22: #{conv_batchnorm_relu.1} parent=0 // pred_check
    _
  $region23: #{conv_batchnorm_relu.1} parent=0 // pred_check_branch
    %2266 = sbr.rel (0) target = $region25
  $region24: #{conv_batchnorm_relu.1} parent=0 // pred_region
    _
  $region25: #{conv_batchnorm_relu.1} parent=0 // pred_fallthru
    _
  // Predicated region
  $region26: #{conv_batchnorm_relu.1} parent=0 // pred_check
    _
  $region27: #{conv_batchnorm_relu.1} parent=0 // pred_check_branch
    %2268 = sbr.rel (0) target = $region29
  $region28: #{conv_batchnorm_relu.1} parent=0 // pred_region
    _
  $region29: #{conv_batchnorm_relu.1} parent=0 // pred_fallthru
    _

</llo_original>
